<compile_context>
chip_gen: v7x
topology: tpu7x:2x2x1
jax: 0.10.0
libtpu: 0.0.40
codegen_flags: <defaults>
</compile_context>

<pallas_src>
import functools

import jax
import jax.numpy as jnp
from jax.experimental import pallas as pl
from jax.experimental.pallas import tpu as pltpu

_MATMUL_DTYPE = jnp.bfloat16   # MXU operand dtype
_ACT_DTYPE = jnp.bfloat16      # inter-kernel activation dtype in HBM


# ----------------------------------------------------------------------------
# TSM ('zero' version) on NHWC -- used only by the pure-JAX reference.
# ----------------------------------------------------------------------------
def tsm_zero_nhwc(x_nhwc, t=3):
    NT, H, W, C = x_nhwc.shape
    N = NT // t
    x5 = x_nhwc.reshape(N, t, H, W, C)
    c4 = C // 4
    pre, post, peri = x5[..., :c4], x5[..., c4:2 * c4], x5[..., 2 * c4:]
    pre = jnp.concatenate([jnp.zeros_like(pre[:, :1]), pre[:, :-1]], axis=1)
    post = jnp.concatenate([post[:, 1:], jnp.zeros_like(post[:, :1])], axis=1)
    return jnp.concatenate([pre, post, peri], axis=-1).reshape(NT, H, W, C)


# ----------------------------------------------------------------------------
# Block-banded weight matrix: folds the 3 dx taps and W zero-padding into a
# dense (W*Cin, W*Cout) contraction per dy tap.
# ----------------------------------------------------------------------------
def _band_weights(w_hwio, W, dtype=_MATMUL_DTYPE):
    kh, kw, cin, cout = w_hwio.shape
    dx = jnp.arange(kw)[:, None, None]
    src = jnp.arange(W)[None, :, None]
    dst = jnp.arange(W)[None, None, :]
    band = (src == dst + dx - (kw // 2)).astype(w_hwio.dtype)      # (kw, W, W)
    m = jnp.einsum("xsw,yxio->ysiwo", band, w_hwio)                # (kh,W,ci,W,co)
    return m.reshape(kh, W * cin, W * cout).astype(dtype)


def _pick_frames(NT, H, t, max_rows):
    """Frames per grid step: a multiple of t that divides NT, keeps bt*H <=
    max_rows, and (when possible) leaves grid_n >= 2 so the 'parallel' grid
    axis can be sharded across both v7x TensorCores."""
    n = NT // t
    best = t
    for k in range(1, n + 1):
        if n % k != 0:
            continue
        if k * t * H > max_rows:
            continue
        if n >= 2 and k > n // 2:
            continue
        best = max(best, k * t)
    # TODO(synk): for awkward N (e.g. large primes) this falls back to bt=t;
    #             a cdiv grid with a masked ragged last block would be better.
    return best


# ----------------------------------------------------------------------------
# Kernel 1: 3x3 "same" conv (stride 1, no bias) with
#   - mode="tsm"    : TSM 'zero' temporal shift fused into the prologue
#   - mode="bn_relu": fused pre-activation  x <- relu(x*scale + shift)
#   - per-tap bf16 matmuls on unshifted rows + XLU row-roll of the products
#   - f32 accumulation, bf16 store, per-program partial BN stats (sum, sumsq)
# ----------------------------------------------------------------------------
def _conv_bn_stats_kernel(x_ref, w_ref, scale_ref, shift_ref,
                          y_ref, stats_ref, *, mode, t, c):
    bt, H, F = x_ref.shape
    Fo = y_ref.shape[2]
    kh = w_ref.shape[0]
    R = bt * H

    x = x_ref[...].reshape(R, F)                       # bf16 (R, F)

    if mode == "tsm":
        # TSM 'zero': within each group of t frames the first c//4 channels of
        # every pixel come from the previous frame, the next c//4 from the next
        # frame (zero at group boundaries).  bt % t == 0 and blocks start on
        # group boundaries, so the shift never crosses the block.
        c4 = c // 4
        lane = jax.lax.broadcasted_iota(jnp.int32, (R, F), 1) % c
        rmod = jax.lax.broadcasted_iota(jnp.int32, (R, F), 0) % (t * H)
        zero_frame = jnp.zeros((H, F), x.dtype)
        x_prev = jnp.concatenate([zero_frame, x[:R - H]], axis=0)   # aligned (H rows)
        x_next = jnp.concatenate([x[H:], zero_frame], axis=0)
        pre = jnp.where(rmod >= H, x_prev, jnp.zeros_like(x_prev))          # zero at g==0
        post = jnp.where(rmod < (t - 1) * H, x_next, jnp.zeros_like(x_next))  # zero at g==t-1
        x = jnp.where(lane < c4, pre, jnp.where(lane < 2 * c4, post, x))
        a = x.astype(_MATMUL_DTYPE)
    elif mode == "bn_relu":
        xf = x.astype(jnp.float32)
        a = jnp.maximum(xf * scale_ref[...] + shift_ref[...], 0.0).astype(_MATMUL_DTYPE)
    else:
        a = x.astype(_MATMUL_DTYPE)

    # 3x3 "same" conv over H: out[h] = x[h-1]@W0 + x[h]@W1 + x[h+1]@W2.
    # Compute the per-tap products on the *unshifted* rows, then shift the
    # products by +/-1 row (XLU sublane roll) and zero the per-frame halo row.
    # TODO(synk): on v6e/v7x a single K=3*W*Cin=384 matmul would fill the
    #             256-deep MXU better; kept per-tap (128x128) for v5e and
    #             because the block is HBM-bound at this size.
    p0 = jnp.dot(a, w_ref[0], preferred_element_type=jnp.float32)
    p1 = jnp.dot(a, w_ref[1], preferred_element_type=jnp.float32)
    p2 = jnp.dot(a, w_ref[2], preferred_element_type=jnp.float32)
    h_idx = jax.lax.broadcasted_iota(jnp.int32, (R, Fo), 0) % H
    acc = p1
    acc = acc + jnp.where(h_idx == 0, 0.0, pltpu.roll(p0, 1, 0))
    acc = acc + jnp.where(h_idx == H - 1, 0.0, pltpu.roll(p2, R - 1, 0))

    y_ref[...] = acc.reshape(bt, H, Fo).astype(y_ref.dtype)

    # Per-program partial stats over (w, co) lanes; folded in the wrapper.
    # Single contiguous (1, 2, Fo) store (no two separate masked sublane writes).
    s = jnp.sum(acc, axis=0, keepdims=True)                     # (1, Fo)
    sq = jnp.sum(acc * acc, axis=0, keepdims=True)              # (1, Fo)
    stats_ref[...] = jnp.concatenate([s, sq], axis=0).reshape(1, 2, Fo)


def conv3x3_bn_stats(x_flat, w_band, scale_lane, shift_lane, *, mode, t, c, bt=None):
    # TODO(synk): stride>1 / downsample path of BasicBlock not implemented
    #             (module defaults: stride=1, downsample=None).
    NT, H, F = x_flat.shape
    kh, F2, Fo = w_band.shape
    assert F2 == F and kh == 3
    if bt is None:
        bt = _pick_frames(NT, H, t, max_rows=1024)
    grid_n = NT // bt
    kern = functools.partial(_conv_bn_stats_kernel, mode=mode, t=t, c=c)

    # VMEM footprint per step is < 1 MiB (bf16 blocks), far below even the
    # v7x 32 MiB scoped default, so no explicit vmem_limit_bytes is needed.
    y, part_stats = pl.pallas_call(
        kern,
        out_shape=(jax.ShapeDtypeStruct((NT, H, Fo), _ACT_DTYPE),
                   jax.ShapeDtypeStruct((grid_n, 2, Fo), jnp.float32)),
        grid_spec=pltpu.PrefetchScalarGridSpec(
            num_scalar_prefetch=0,
            grid=(grid_n,),
            in_specs=[
                pl.BlockSpec((bt, H, F), lambda n: (n, 0, 0)),
                # Constant weight / scale / shift blocks; pl.Buffered(1) would
                # save one VMEM buffer per operand — negligible at 3x128x128.
                pl.BlockSpec((kh, F, Fo), lambda n: (0, 0, 0)),
                pl.BlockSpec((1, F), lambda n: (0, 0)),
                pl.BlockSpec((1, F), lambda n: (0, 0)),
            ],
            out_specs=[
                pl.BlockSpec((bt, H, Fo), lambda n: (n, 0, 0)),
                # Per-program partials -> no cross-step carry -> grid axis is
                # "parallel" (uses both TensorCores on v7x; grid_n >= 2).
                pl.BlockSpec((1, 2, Fo), lambda n: (n, 0, 0)),
            ],
        ),
        compiler_params=pltpu.CompilerParams(
            dimension_semantics=("parallel",)),
    )(x_flat, w_band, scale_lane, shift_lane)
    return y, part_stats.sum(axis=0)


# ----------------------------------------------------------------------------
# Kernel 2: fused BN2-apply + residual add + ReLU, lane-dense multi-frame blocks.
# bf16 activation streams in, f32 final output out.
# ----------------------------------------------------------------------------
def _bn_add_relu_kernel(y_ref, scale_ref, shift_ref, res_ref, o_ref):
    y = y_ref[...].astype(jnp.float32)
    r = res_ref[...].astype(jnp.float32)
    o_ref[...] = jnp.maximum(y * scale_ref[...] + shift_ref[...] + r, 0.0)


def bn_add_relu(y_flat, scale_lane, shift_lane, res_flat, bt=None):
    NT, H, Fo = y_flat.shape
    if bt is None:
        bt = _pick_frames(NT, H, 1, max_rows=2048)
    grid_n = NT // bt
    blk = pl.BlockSpec((bt, H, Fo), lambda n: (n, 0, 0))
    vec = pl.BlockSpec((1, Fo), lambda n: (0, 0))
    return pl.pallas_call(
        _bn_add_relu_kernel,
        out_shape=jax.ShapeDtypeStruct((NT, H, Fo), jnp.float32),
        grid_spec=pltpu.PrefetchScalarGridSpec(
            num_scalar_prefetch=0,
            grid=(grid_n,),
            in_specs=[blk, vec, vec, blk],
            out_specs=blk,
        ),
        compiler_params=pltpu.CompilerParams(
            dimension_semantics=("parallel",)),
    )(y_flat, scale_lane, shift_lane, res_flat)


# ----------------------------------------------------------------------------
# Training-mode BN: fold lane-wise partial stats -> per-channel scale/shift,
# returned lane-tiled (1, W*C) so kernels broadcast without any reshuffle.
# ----------------------------------------------------------------------------
def bn_lane_scale_shift(stats_lane, count, gamma, beta, W, eps=1e-5):
    cout = gamma.shape[0]
    s = stats_lane.reshape(2, W, cout).sum(axis=1)      # (2, Cout)
    mean = s[0] / count
    # Single-pass E[x^2]-E[x]^2 in f32, clamped at 0 (guards rsqrt).
    var = jnp.maximum(s[1] / count - mean * mean, 0.0)
    scale = gamma * jax.lax.rsqrt(var + eps)
    shift = beta - mean * scale
    return (jnp.tile(scale, W)[None, :].astype(jnp.float32),
            jnp.tile(shift, W)[None, :].astype(jnp.float32))


# ----------------------------------------------------------------------------
# BasicBlock forward (inplanes == planes, stride=1, downsample=None).
# ----------------------------------------------------------------------------
def basic_block_forward(x_nchw, params, t=3):
    NT, C, H, W = x_nchw.shape
    cout = params["w1"].shape[-1]
    assert cout == C, "residual path requires inplanes == planes"
    assert NT % t == 0, "batch dim must be N*T"
    F = W * C
    assert F % 128 == 0, "lane-dense layout assumes W*C is a multiple of 128"
    # TODO(synk): once W*Cin >> 128 the banded formulation wastes MXU FLOPs
    #             (only 3/W nonzero); switch to per-tap K=Cin matmuls there.

    # Single boundary transpose + downcast; residual kept in bf16 too.
    x_flat = jnp.transpose(x_nchw, (0, 2, 3, 1)).reshape(NT, H, F).astype(_ACT_DTYPE)

    w1b = _band_weights(params["w1"], W)                          # (3, W*C, W*Co)
    w2b = _band_weights(params["w2"], W)

    ones = jnp.ones((1, F), jnp.float32)
    zeros = jnp.zeros((1, F), jnp.float32)
    count = NT * H * W

    # conv1 with fused TSM prologue + BN1 partial stats
    y1, st1 = conv3x3_bn_stats(x_flat, w1b, ones, zeros, mode="tsm", t=t, c=C)
    s1, b1 = bn_lane_scale_shift(st1, count, params["gamma1"], params["beta1"], W)

    # conv2 with fused BN1-apply + ReLU prologue, + BN2 partial stats
    y2, st2 = conv3x3_bn_stats(y1, w2b, s1, b1, mode="bn_relu", t=t, c=C)
    s2, b2 = bn_lane_scale_shift(st2, count, params["gamma2"], params["beta2"], W)

    # BN2-apply + residual + ReLU
    o_flat = bn_add_relu(y2, s2, b2, x_flat)
    return jnp.transpose(o_flat.reshape(NT, H, W, cout), (0, 3, 1, 2))


# ----------------------------------------------------------------------------
# Pure-JAX reference mirroring the kernel numerics (bf16 activation streams,
# bf16 MXU operands, f32 accumulation / BN), for correctness checking.
# ----------------------------------------------------------------------------
def ref_forward(x_nchw, params, t=3, eps=1e-5):
    bf = _MATMUL_DTYPE

    def conv(x_bf16, w):
        return jax.lax.conv_general_dilated(
            x_bf16, w.astype(bf), window_strides=(1, 1), padding="SAME",
            dimension_numbers=("NHWC", "HWIO", "NHWC"),
            preferred_element_type=jnp.float32)

    def bn_scale_shift(x_f32, gamma, beta):
        mean = x_f32.mean(axis=(0, 1, 2))
        var = jnp.maximum((x_f32 * x_f32).mean(axis=(0, 1, 2)) - mean * mean, 0.0)
        scale = gamma * jax.lax.rsqrt(var + eps)
        return scale, beta - mean * scale

    identity = jnp.transpose(x_nchw, (0, 2, 3, 1)).astype(bf)
    xt = tsm_zero_nhwc(identity, t)                               # exact blend
    c1 = conv(xt, params["w1"])                                   # f32
    s1, b1 = bn_scale_shift(c1, params["gamma1"], params["beta1"])
    y1 = c1.astype(bf)                                            # HBM round-trip
    a1 = jnp.maximum(y1.astype(jnp.float32) * s1 + b1, 0.0).astype(bf)
    c2 = conv(a1, params["w2"])
    s2, b2 = bn_scale_shift(c2, params["gamma2"], params["beta2"])
    y2 = c2.astype(bf)
    out = jnp.maximum(y2.astype(jnp.float32) * s2 + b2 + identity.astype(jnp.float32), 0.0)
    return jnp.transpose(out, (0, 3, 1, 2))


if __name__ == "__main__":
    key = jax.random.PRNGKey(0)
    k1, k2, k3, k4, k5 = jax.random.split(key, 5)

    N, T, C, H, W = 2, 3, 8, 16, 16     # C % 4 == 0 for TSM; W*C = 128 lanes
    planes = C                           # inplanes == planes -> residual adds

    x = jax.random.normal(k1, (N * T, C, H, W), jnp.float32)

    # Deterministic parameter init (PyTorch OIHW layout -> HWIO).
    w1_oihw = 0.1 * jax.random.normal(k2, (planes, C, 3, 3), jnp.float32)
    w2_oihw = 0.1 * jax.random.normal(k3, (planes, planes, 3, 3), jnp.float32)
    params = dict(
        w1=jnp.transpose(w1_oihw, (2, 3, 1, 0)),
        w2=jnp.transpose(w2_oihw, (2, 3, 1, 0)),
        gamma1=1.0 + 0.1 * jax.random.normal(k4, (planes,), jnp.float32),
        beta1=jnp.zeros((planes,), jnp.float32),
        gamma2=1.0 + 0.1 * jax.random.normal(k5, (planes,), jnp.float32),
        beta2=jnp.zeros((planes,), jnp.float32),
    )

    fwd = jax.jit(functools.partial(basic_block_forward, t=T))
    out = jax.block_until_ready(fwd(x, params))

    ref = jax.jit(functools.partial(ref_forward, t=T))(x, params)
    err = float(jnp.max(jnp.abs(out - ref)))
    # Tolerance covers summation-order differences vs. XLA's conv (same bf16
    # activation / f32 accumulation pipeline on both sides).
    assert jnp.allclose(out, ref, rtol=5e-3, atol=5e-3), f"max abs err {err}"

    print("KERNEL_OK")
</pallas_src>

<mosaic_0001>
module attributes {stable_mosaic.version = 11 : i64} {
  func.func @_conv_bn_stats_kernel(%arg0: i32, %arg1: memref<3x16x128xbf16, #tpu.memory_space<vmem>>, %arg2: memref<3x128x128xbf16, #tpu.memory_space<vmem>>, %arg3: memref<1x128xf32, #tpu.memory_space<vmem>>, %arg4: memref<1x128xf32, #tpu.memory_space<vmem>>, %arg5: memref<3x16x128xbf16, #tpu.memory_space<vmem>>, %arg6: memref<1x2x128xf32, #tpu.memory_space<vmem>>) attributes {dimension_semantics = [#tpu.dimension_semantics<parallel>], iteration_bounds = array<i64: 2>, scalar_prefetch = 0 : i64, scratch_operands = 0 : i64, tpu.core_type = #tpu.core_type<tc>, window_params = [{transform_indices = @transform_0, window_bounds = array<i64: 3, 16, 128>}, {pipeline_mode = #tpu.pipeline_mode<synchronous>, transform_indices = @transform_1, window_bounds = array<i64: 3, 128, 128>}, {pipeline_mode = #tpu.pipeline_mode<synchronous>, transform_indices = @transform_2, window_bounds = array<i64: 1, 128>}, {pipeline_mode = #tpu.pipeline_mode<synchronous>, transform_indices = @transform_3, window_bounds = array<i64: 1, 128>}, {transform_indices = @transform_4, window_bounds = array<i64: 3, 16, 128>}, {transform_indices = @transform_5, window_bounds = array<i64: 1, 2, 128>}]} {
    %c0 = arith.constant 0 : index
    %c0_0 = arith.constant 0 : index
    %c0_1 = arith.constant 0 : index
    %0 = vector.load %arg1[%c0, %c0_0, %c0_1] : memref<3x16x128xbf16, #tpu.memory_space<vmem>>, vector<3x16x128xbf16>
    %1 = vector.shape_cast %0 : vector<3x16x128xbf16> to vector<48x128xbf16>
    %2 = tpu.iota {dimensions = array<i32: 1>} : vector<48x128xi32>
    %c8_i32 = arith.constant 8 : i32
    %c0_i32 = arith.constant 0 : i32
    %3 = arith.cmpi eq, %c8_i32, %c0_i32 : i32
    %c1_i32 = arith.constant 1 : i32
    %4 = arith.select %3, %c1_i32, %c8_i32 : i32
    %5 = vector.broadcast %4 : i32 to vector<48x128xi32>
    %6 = arith.remsi %2, %5 : vector<48x128xi32>
    %c0_i32_2 = arith.constant 0 : i32
    %7 = vector.broadcast %c0_i32_2 : i32 to vector<48x128xi32>
    %8 = arith.cmpi ne, %6, %7 : vector<48x128xi32>
    %c0_i32_3 = arith.constant 0 : i32
    %9 = vector.broadcast %c0_i32_3 : i32 to vector<48x128xi32>
    %10 = arith.cmpi slt, %6, %9 : vector<48x128xi32>
    %c0_i32_4 = arith.constant 0 : i32
    %11 = arith.cmpi slt, %4, %c0_i32_4 : i32
    %12 = vector.broadcast %11 : i1 to vector<48x128xi1>
    %13 = vector.broadcast %12 : vector<48x128xi1> to vector<48x128xi1>
    %14 = arith.xori %10, %13 : vector<48x128xi1>
    %15 = arith.andi %14, %8 : vector<48x128xi1>
    %16 = vector.broadcast %4 : i32 to vector<48x128xi32>
    %17 = arith.addi %6, %16 : vector<48x128xi32>
    %18 = arith.select %15, %17, %6 : vector<48x128xi1>, vector<48x128xi32>
    %19 = tpu.iota {dimensions = array<i32: 0>} : vector<48x128xi32>
    %c48_i32 = arith.constant 48 : i32
    %c0_i32_5 = arith.constant 0 : i32
    %20 = arith.cmpi eq, %c48_i32, %c0_i32_5 : i32
    %c1_i32_6 = arith.constant 1 : i32
    %21 = arith.select %20, %c1_i32_6, %c48_i32 : i32
    %22 = vector.broadcast %21 : i32 to vector<48x128xi32>
    %23 = arith.remsi %19, %22 : vector<48x128xi32>
    %c0_i32_7 = arith.constant 0 : i32
    %24 = vector.broadcast %c0_i32_7 : i32 to vector<48x128xi32>
    %25 = arith.cmpi ne, %23, %24 : vector<48x128xi32>
    %c0_i32_8 = arith.constant 0 : i32
    %26 = vector.broadcast %c0_i32_8 : i32 to vector<48x128xi32>
    %27 = arith.cmpi slt, %23, %26 : vector<48x128xi32>
    %c0_i32_9 = arith.constant 0 : i32
    %28 = arith.cmpi slt, %21, %c0_i32_9 : i32
    %29 = vector.broadcast %28 : i1 to vector<48x128xi1>
    %30 = vector.broadcast %29 : vector<48x128xi1> to vector<48x128xi1>
    %31 = arith.xori %27, %30 : vector<48x128xi1>
    %32 = arith.andi %31, %25 : vector<48x128xi1>
    %33 = vector.broadcast %21 : i32 to vector<48x128xi32>
    %34 = arith.addi %23, %33 : vector<48x128xi32>
    %35 = arith.select %32, %34, %23 : vector<48x128xi1>, vector<48x128xi32>
    %cst = arith.constant 0.000000e+00 : bf16
    %36 = vector.broadcast %cst : bf16 to vector<16x128xbf16>
    %37 = vector.extract_strided_slice %1 {offsets = [0, 0], sizes = [32, 128], strides = [1, 1]} : vector<48x128xbf16> to vector<32x128xbf16>
    %38 = tpu.concatenate %36, %37 in 0 : vector<16x128xbf16>, vector<32x128xbf16> -> vector<48x128xbf16>
    %39 = vector.extract_strided_slice %1 {offsets = [16, 0], sizes = [32, 128], strides = [1, 1]} : vector<48x128xbf16> to vector<32x128xbf16>
    %40 = tpu.concatenate %39, %36 in 0 : vector<32x128xbf16>, vector<16x128xbf16> -> vector<48x128xbf16>
    %c16_i32 = arith.constant 16 : i32
    %41 = vector.broadcast %c16_i32 : i32 to vector<48x128xi32>
    %42 = arith.cmpi sge, %35, %41 : vector<48x128xi32>
    %cst_10 = arith.constant 0.000000e+00 : bf16
    %43 = vector.broadcast %cst_10 : bf16 to vector<48x128xbf16>
    %44 = arith.select %42, %38, %43 : vector<48x128xi1>, vector<48x128xbf16>
    %c32_i32 = arith.constant 32 : i32
    %45 = vector.broadcast %c32_i32 : i32 to vector<48x128xi32>
    %46 = arith.cmpi slt, %35, %45 : vector<48x128xi32>
    %cst_11 = arith.constant 0.000000e+00 : bf16
    %47 = vector.broadcast %cst_11 : bf16 to vector<48x128xbf16>
    %48 = arith.select %46, %40, %47 : vector<48x128xi1>, vector<48x128xbf16>
    %c2_i32 = arith.constant 2 : i32
    %49 = vector.broadcast %c2_i32 : i32 to vector<48x128xi32>
    %50 = arith.cmpi slt, %18, %49 : vector<48x128xi32>
    %c4_i32 = arith.constant 4 : i32
    %51 = vector.broadcast %c4_i32 : i32 to vector<48x128xi32>
    %52 = arith.cmpi slt, %18, %51 : vector<48x128xi32>
    %53 = arith.select %52, %48, %1 : vector<48x128xi1>, vector<48x128xbf16>
    %54 = arith.select %50, %44, %53 : vector<48x128xi1>, vector<48x128xbf16>
    %c0_12 = arith.constant 0 : index
    %c0_13 = arith.constant 0 : index
    %c0_14 = arith.constant 0 : index
    %55 = vector.load %arg2[%c0_12, %c0_13, %c0_14] : memref<3x128x128xbf16, #tpu.memory_space<vmem>>, vector<1x128x128xbf16>
    %56 = vector.shape_cast %55 : vector<1x128x128xbf16> to vector<128x128xbf16>
    %cst_15 = arith.constant dense<0.000000e+00> : vector<48x128xf32>
    %57 = tpu.matmul %54, %56, %cst_15 {dimension_numbers = #tpu.dot_dimension_numbers<[1], [0], [0], [1], [0, 0, 1, 1], [], []>} : vector<48x128xbf16>, vector<128x128xbf16>, vector<48x128xf32> -> vector<48x128xf32>
    %c1 = arith.constant 1 : index
    %c0_16 = arith.constant 0 : index
    %c0_17 = arith.constant 0 : index
    %58 = vector.load %arg2[%c1, %c0_16, %c0_17] : memref<3x128x128xbf16, #tpu.memory_space<vmem>>, vector<1x128x128xbf16>
    %59 = vector.shape_cast %58 : vector<1x128x128xbf16> to vector<128x128xbf16>
    %cst_18 = arith.constant dense<0.000000e+00> : vector<48x128xf32>
    %60 = tpu.matmul %54, %59, %cst_18 {dimension_numbers = #tpu.dot_dimension_numbers<[1], [0], [0], [1], [0, 0, 1, 1], [], []>} : vector<48x128xbf16>, vector<128x128xbf16>, vector<48x128xf32> -> vector<48x128xf32>
    %c2 = arith.constant 2 : index
    %c0_19 = arith.constant 0 : index
    %c0_20 = arith.constant 0 : index
    %61 = vector.load %arg2[%c2, %c0_19, %c0_20] : memref<3x128x128xbf16, #tpu.memory_space<vmem>>, vector<1x128x128xbf16>
    %62 = vector.shape_cast %61 : vector<1x128x128xbf16> to vector<128x128xbf16>
    %cst_21 = arith.constant dense<0.000000e+00> : vector<48x128xf32>
    %63 = tpu.matmul %54, %62, %cst_21 {dimension_numbers = #tpu.dot_dimension_numbers<[1], [0], [0], [1], [0, 0, 1, 1], [], []>} : vector<48x128xbf16>, vector<128x128xbf16>, vector<48x128xf32> -> vector<48x128xf32>
    %64 = tpu.iota {dimensions = array<i32: 0>} : vector<48x128xi32>
    %c16_i32_22 = arith.constant 16 : i32
    %c0_i32_23 = arith.constant 0 : i32
    %65 = arith.cmpi eq, %c16_i32_22, %c0_i32_23 : i32
    %c1_i32_24 = arith.constant 1 : i32
    %66 = arith.select %65, %c1_i32_24, %c16_i32_22 : i32
    %67 = vector.broadcast %66 : i32 to vector<48x128xi32>
    %68 = arith.remsi %64, %67 : vector<48x128xi32>
    %c0_i32_25 = arith.constant 0 : i32
    %69 = vector.broadcast %c0_i32_25 : i32 to vector<48x128xi32>
    %70 = arith.cmpi ne, %68, %69 : vector<48x128xi32>
    %c0_i32_26 = arith.constant 0 : i32
    %71 = vector.broadcast %c0_i32_26 : i32 to vector<48x128xi32>
    %72 = arith.cmpi slt, %68, %71 : vector<48x128xi32>
    %c0_i32_27 = arith.constant 0 : i32
    %73 = arith.cmpi slt, %66, %c0_i32_27 : i32
    %74 = vector.broadcast %73 : i1 to vector<48x128xi1>
    %75 = vector.broadcast %74 : vector<48x128xi1> to vector<48x128xi1>
    %76 = arith.xori %72, %75 : vector<48x128xi1>
    %77 = arith.andi %76, %70 : vector<48x128xi1>
    %78 = vector.broadcast %66 : i32 to vector<48x128xi32>
    %79 = arith.addi %68, %78 : vector<48x128xi32>
    %80 = arith.select %77, %79, %68 : vector<48x128xi1>, vector<48x128xi32>
    %c0_i32_28 = arith.constant 0 : i32
    %81 = vector.broadcast %c0_i32_28 : i32 to vector<48x128xi32>
    %82 = arith.cmpi eq, %80, %81 : vector<48x128xi32>
    %c1_i32_29 = arith.constant 1 : i32
    %83 = tpu.dynamic_rotate %57 by %c1_i32_29 dim 0 : vector<48x128xf32>, i32 -> vector<48x128xf32>
    %cst_30 = arith.constant 0.000000e+00 : f32
    %84 = vector.broadcast %cst_30 : f32 to vector<48x128xf32>
    %85 = arith.select %82, %84, %83 : vector<48x128xi1>, vector<48x128xf32>
    %86 = arith.addf %60, %85 : vector<48x128xf32>
    %c15_i32 = arith.constant 15 : i32
    %87 = vector.broadcast %c15_i32 : i32 to vector<48x128xi32>
    %88 = arith.cmpi eq, %80, %87 : vector<48x128xi32>
    %c47_i32 = arith.constant 47 : i32
    %89 = tpu.dynamic_rotate %63 by %c47_i32 dim 0 : vector<48x128xf32>, i32 -> vector<48x128xf32>
    %cst_31 = arith.constant 0.000000e+00 : f32
    %90 = vector.broadcast %cst_31 : f32 to vector<48x128xf32>
    %91 = arith.select %88, %90, %89 : vector<48x128xi1>, vector<48x128xf32>
    %92 = arith.addf %86, %91 : vector<48x128xf32>
    %93 = vector.shape_cast %92 : vector<48x128xf32> to vector<3x16x128xf32>
    %94 = arith.truncf %93 : vector<3x16x128xf32> to vector<3x16x128xbf16>
    %c0_32 = arith.constant 0 : index
    %c0_33 = arith.constant 0 : index
    %c0_34 = arith.constant 0 : index
    %95 = vector.load %arg5[%c0_32, %c0_33, %c0_34] : memref<3x16x128xbf16, #tpu.memory_space<vmem>>, vector<3x16x128xbf16>
    tpu.vector_store %arg5[%c0_32, %c0_33, %c0_34], %94 {strides = array<i32>} : memref<3x16x128xbf16, #tpu.memory_space<vmem>>, vector<3x16x128xbf16>,
    %cst_35 = arith.constant dense<0.000000e+00> : vector<128xf32>
    %96 = vector.multi_reduction <add>, %92, %cst_35 [0] : vector<48x128xf32> to vector<128xf32>
    %97 = vector.shape_cast %96 : vector<128xf32> to vector<1x128xf32>
    %98 = arith.mulf %92, %92 : vector<48x128xf32>
    %cst_36 = arith.constant dense<0.000000e+00> : vector<128xf32>
    %99 = vector.multi_reduction <add>, %98, %cst_36 [0] : vector<48x128xf32> to vector<128xf32>
    %100 = vector.shape_cast %99 : vector<128xf32> to vector<1x128xf32>
    %101 = tpu.concatenate %97, %100 in 0 : vector<1x128xf32>, vector<1x128xf32> -> vector<2x128xf32>
    %102 = vector.shape_cast %101 : vector<2x128xf32> to vector<1x2x128xf32>
    %c0_37 = arith.constant 0 : index
    %c0_38 = arith.constant 0 : index
    %c0_39 = arith.constant 0 : index
    %103 = vector.load %arg6[%c0_37, %c0_38, %c0_39] : memref<1x2x128xf32, #tpu.memory_space<vmem>>, vector<1x2x128xf32>
    tpu.vector_store %arg6[%c0_37, %c0_38, %c0_39], %102 {strides = array<i32>} : memref<1x2x128xf32, #tpu.memory_space<vmem>>, vector<1x2x128xf32>,
    return
  }
  func.func @transform_0(%arg0: i32) -> (i32, i32, i32) {
    %c0_i32 = arith.constant 0 : i32
    %c0_i32_0 = arith.constant 0 : i32
    %c0_i32_1 = arith.constant 0 : i32
    return %arg0, %c0_i32, %c0_i32_0 : i32, i32, i32
  }
  func.func @transform_1(%arg0: i32) -> (i32, i32, i32) {
    %c0_i32 = arith.constant 0 : i32
    %c0_i32_0 = arith.constant 0 : i32
    %c0_i32_1 = arith.constant 0 : i32
    %c0_i32_2 = arith.constant 0 : i32
    return %c0_i32, %c0_i32_0, %c0_i32_1 : i32, i32, i32
  }
  func.func @transform_2(%arg0: i32) -> (i32, i32) {
    %c0_i32 = arith.constant 0 : i32
    %c0_i32_0 = arith.constant 0 : i32
    %c0_i32_1 = arith.constant 0 : i32
    return %c0_i32, %c0_i32_0 : i32, i32
  }
  func.func @transform_3(%arg0: i32) -> (i32, i32) {
    %c0_i32 = arith.constant 0 : i32
    %c0_i32_0 = arith.constant 0 : i32
    %c0_i32_1 = arith.constant 0 : i32
    return %c0_i32, %c0_i32_0 : i32, i32
  }
  func.func @transform_4(%arg0: i32) -> (i32, i32, i32) {
    %c0_i32 = arith.constant 0 : i32
    %c0_i32_0 = arith.constant 0 : i32
    %c0_i32_1 = arith.constant 0 : i32
    return %arg0, %c0_i32, %c0_i32_0 : i32, i32, i32
  }
  func.func @transform_5(%arg0: i32) -> (i32, i32, i32) {
    %c0_i32 = arith.constant 0 : i32
    %c0_i32_0 = arith.constant 0 : i32
    %c0_i32_1 = arith.constant 0 : i32
    return %arg0, %c0_i32, %c0_i32_0 : i32, i32, i32
  }
}

module attributes {stable_mosaic.version = 11 : i64} {
  func.func @_conv_bn_stats_kernel(%arg0: i32, %arg1: memref<3x16x128xbf16, #tpu.memory_space<vmem>>, %arg2: memref<3x128x128xbf16, #tpu.memory_space<vmem>>, %arg3: memref<1x128xf32, #tpu.memory_space<vmem>>, %arg4: memref<1x128xf32, #tpu.memory_space<vmem>>, %arg5: memref<3x16x128xbf16, #tpu.memory_space<vmem>>, %arg6: memref<1x2x128xf32, #tpu.memory_space<vmem>>) attributes {dimension_semantics = [#tpu.dimension_semantics<parallel>], iteration_bounds = array<i64: 2>, scalar_prefetch = 0 : i64, scratch_operands = 0 : i64, tpu.core_type = #tpu.core_type<tc>, window_params = [{transform_indices = @transform_0, window_bounds = array<i64: 3, 16, 128>}, {pipeline_mode = #tpu.pipeline_mode<synchronous>, transform_indices = @transform_1, window_bounds = array<i64: 3, 128, 128>}, {pipeline_mode = #tpu.pipeline_mode<synchronous>, transform_indices = @transform_2, window_bounds = array<i64: 1, 128>}, {pipeline_mode = #tpu.pipeline_mode<synchronous>, transform_indices = @transform_3, window_bounds = array<i64: 1, 128>}, {transform_indices = @transform_4, window_bounds = array<i64: 3, 16, 128>}, {transform_indices = @transform_5, window_bounds = array<i64: 1, 2, 128>}]} {
    %c0 = arith.constant 0 : index
    %c0_0 = arith.constant 0 : index
    %c0_1 = arith.constant 0 : index
    %0 = vector.load %arg1[%c0, %c0_0, %c0_1] : memref<3x16x128xbf16, #tpu.memory_space<vmem>>, vector<3x16x128xbf16>
    %1 = vector.shape_cast %0 : vector<3x16x128xbf16> to vector<48x128xbf16>
    %2 = arith.extf %1 : vector<48x128xbf16> to vector<48x128xf32>
    %c0_2 = arith.constant 0 : index
    %c0_3 = arith.constant 0 : index
    %3 = vector.load %arg3[%c0_2, %c0_3] : memref<1x128xf32, #tpu.memory_space<vmem>>, vector<1x128xf32>
    %4 = vector.broadcast %3 : vector<1x128xf32> to vector<48x128xf32>
    %5 = arith.mulf %2, %4 : vector<48x128xf32>
    %c0_4 = arith.constant 0 : index
    %c0_5 = arith.constant 0 : index
    %6 = vector.load %arg4[%c0_4, %c0_5] : memref<1x128xf32, #tpu.memory_space<vmem>>, vector<1x128xf32>
    %7 = vector.broadcast %6 : vector<1x128xf32> to vector<48x128xf32>
    %8 = arith.addf %5, %7 : vector<48x128xf32>
    %cst = arith.constant 0.000000e+00 : f32
    %9 = vector.broadcast %cst : f32 to vector<48x128xf32>
    %10 = arith.maximumf %8, %9 : vector<48x128xf32>
    %11 = arith.truncf %10 : vector<48x128xf32> to vector<48x128xbf16>
    %c0_6 = arith.constant 0 : index
    %c0_7 = arith.constant 0 : index
    %c0_8 = arith.constant 0 : index
    %12 = vector.load %arg2[%c0_6, %c0_7, %c0_8] : memref<3x128x128xbf16, #tpu.memory_space<vmem>>, vector<1x128x128xbf16>
    %13 = vector.shape_cast %12 : vector<1x128x128xbf16> to vector<128x128xbf16>
    %cst_9 = arith.constant dense<0.000000e+00> : vector<48x128xf32>
    %14 = tpu.matmul %11, %13, %cst_9 {dimension_numbers = #tpu.dot_dimension_numbers<[1], [0], [0], [1], [0, 0, 1, 1], [], []>} : vector<48x128xbf16>, vector<128x128xbf16>, vector<48x128xf32> -> vector<48x128xf32>
    %c1 = arith.constant 1 : index
    %c0_10 = arith.constant 0 : index
    %c0_11 = arith.constant 0 : index
    %15 = vector.load %arg2[%c1, %c0_10, %c0_11] : memref<3x128x128xbf16, #tpu.memory_space<vmem>>, vector<1x128x128xbf16>
    %16 = vector.shape_cast %15 : vector<1x128x128xbf16> to vector<128x128xbf16>
    %cst_12 = arith.constant dense<0.000000e+00> : vector<48x128xf32>
    %17 = tpu.matmul %11, %16, %cst_12 {dimension_numbers = #tpu.dot_dimension_numbers<[1], [0], [0], [1], [0, 0, 1, 1], [], []>} : vector<48x128xbf16>, vector<128x128xbf16>, vector<48x128xf32> -> vector<48x128xf32>
    %c2 = arith.constant 2 : index
    %c0_13 = arith.constant 0 : index
    %c0_14 = arith.constant 0 : index
    %18 = vector.load %arg2[%c2, %c0_13, %c0_14] : memref<3x128x128xbf16, #tpu.memory_space<vmem>>, vector<1x128x128xbf16>
    %19 = vector.shape_cast %18 : vector<1x128x128xbf16> to vector<128x128xbf16>
    %cst_15 = arith.constant dense<0.000000e+00> : vector<48x128xf32>
    %20 = tpu.matmul %11, %19, %cst_15 {dimension_numbers = #tpu.dot_dimension_numbers<[1], [0], [0], [1], [0, 0, 1, 1], [], []>} : vector<48x128xbf16>, vector<128x128xbf16>, vector<48x128xf32> -> vector<48x128xf32>
    %21 = tpu.iota {dimensions = array<i32: 0>} : vector<48x128xi32>
    %c16_i32 = arith.constant 16 : i32
    %c0_i32 = arith.constant 0 : i32
    %22 = arith.cmpi eq, %c16_i32, %c0_i32 : i32
    %c1_i32 = arith.constant 1 : i32
    %23 = arith.select %22, %c1_i32, %c16_i32 : i32
    %24 = vector.broadcast %23 : i32 to vector<48x128xi32>
    %25 = arith.remsi %21, %24 : vector<48x128xi32>
    %c0_i32_16 = arith.constant 0 : i32
    %26 = vector.broadcast %c0_i32_16 : i32 to vector<48x128xi32>
    %27 = arith.cmpi ne, %25, %26 : vector<48x128xi32>
    %c0_i32_17 = arith.constant 0 : i32
    %28 = vector.broadcast %c0_i32_17 : i32 to vector<48x128xi32>
    %29 = arith.cmpi slt, %25, %28 : vector<48x128xi32>
    %c0_i32_18 = arith.constant 0 : i32
    %30 = arith.cmpi slt, %23, %c0_i32_18 : i32
    %31 = vector.broadcast %30 : i1 to vector<48x128xi1>
    %32 = vector.broadcast %31 : vector<48x128xi1> to vector<48x128xi1>
    %33 = arith.xori %29, %32 : vector<48x128xi1>
    %34 = arith.andi %33, %27 : vector<48x128xi1>
    %35 = vector.broadcast %23 : i32 to vector<48x128xi32>
    %36 = arith.addi %25, %35 : vector<48x128xi32>
    %37 = arith.select %34, %36, %25 : vector<48x128xi1>, vector<48x128xi32>
    %c0_i32_19 = arith.constant 0 : i32
    %38 = vector.broadcast %c0_i32_19 : i32 to vector<48x128xi32>
    %39 = arith.cmpi eq, %37, %38 : vector<48x128xi32>
    %c1_i32_20 = arith.constant 1 : i32
    %40 = tpu.dynamic_rotate %14 by %c1_i32_20 dim 0 : vector<48x128xf32>, i32 -> vector<48x128xf32>
    %cst_21 = arith.constant 0.000000e+00 : f32
    %41 = vector.broadcast %cst_21 : f32 to vector<48x128xf32>
    %42 = arith.select %39, %41, %40 : vector<48x128xi1>, vector<48x128xf32>
    %43 = arith.addf %17, %42 : vector<48x128xf32>
    %c15_i32 = arith.constant 15 : i32
    %44 = vector.broadcast %c15_i32 : i32 to vector<48x128xi32>
    %45 = arith.cmpi eq, %37, %44 : vector<48x128xi32>
    %c47_i32 = arith.constant 47 : i32
    %46 = tpu.dynamic_rotate %20 by %c47_i32 dim 0 : vector<48x128xf32>, i32 -> vector<48x128xf32>
    %cst_22 = arith.constant 0.000000e+00 : f32
    %47 = vector.broadcast %cst_22 : f32 to vector<48x128xf32>
    %48 = arith.select %45, %47, %46 : vector<48x128xi1>, vector<48x128xf32>
    %49 = arith.addf %43, %48 : vector<48x128xf32>
    %50 = vector.shape_cast %49 : vector<48x128xf32> to vector<3x16x128xf32>
    %51 = arith.truncf %50 : vector<3x16x128xf32> to vector<3x16x128xbf16>
    %c0_23 = arith.constant 0 : index
    %c0_24 = arith.constant 0 : index
    %c0_25 = arith.constant 0 : index
    %52 = vector.load %arg5[%c0_23, %c0_24, %c0_25] : memref<3x16x128xbf16, #tpu.memory_space<vmem>>, vector<3x16x128xbf16>
    tpu.vector_store %arg5[%c0_23, %c0_24, %c0_25], %51 {strides = array<i32>} : memref<3x16x128xbf16, #tpu.memory_space<vmem>>, vector<3x16x128xbf16>,
    %cst_26 = arith.constant dense<0.000000e+00> : vector<128xf32>
    %53 = vector.multi_reduction <add>, %49, %cst_26 [0] : vector<48x128xf32> to vector<128xf32>
    %54 = vector.shape_cast %53 : vector<128xf32> to vector<1x128xf32>
    %55 = arith.mulf %49, %49 : vector<48x128xf32>
    %cst_27 = arith.constant dense<0.000000e+00> : vector<128xf32>
    %56 = vector.multi_reduction <add>, %55, %cst_27 [0] : vector<48x128xf32> to vector<128xf32>
    %57 = vector.shape_cast %56 : vector<128xf32> to vector<1x128xf32>
    %58 = tpu.concatenate %54, %57 in 0 : vector<1x128xf32>, vector<1x128xf32> -> vector<2x128xf32>
    %59 = vector.shape_cast %58 : vector<2x128xf32> to vector<1x2x128xf32>
    %c0_28 = arith.constant 0 : index
    %c0_29 = arith.constant 0 : index
    %c0_30 = arith.constant 0 : index
    %60 = vector.load %arg6[%c0_28, %c0_29, %c0_30] : memref<1x2x128xf32, #tpu.memory_space<vmem>>, vector<1x2x128xf32>
    tpu.vector_store %arg6[%c0_28, %c0_29, %c0_30], %59 {strides = array<i32>} : memref<1x2x128xf32, #tpu.memory_space<vmem>>, vector<1x2x128xf32>,
    return
  }
  func.func @transform_0(%arg0: i32) -> (i32, i32, i32) {
    %c0_i32 = arith.constant 0 : i32
    %c0_i32_0 = arith.constant 0 : i32
    %c0_i32_1 = arith.constant 0 : i32
    return %arg0, %c0_i32, %c0_i32_0 : i32, i32, i32
  }
  func.func @transform_1(%arg0: i32) -> (i32, i32, i32) {
    %c0_i32 = arith.constant 0 : i32
    %c0_i32_0 = arith.constant 0 : i32
    %c0_i32_1 = arith.constant 0 : i32
    %c0_i32_2 = arith.constant 0 : i32
    return %c0_i32, %c0_i32_0, %c0_i32_1 : i32, i32, i32
  }
  func.func @transform_2(%arg0: i32) -> (i32, i32) {
    %c0_i32 = arith.constant 0 : i32
    %c0_i32_0 = arith.constant 0 : i32
    %c0_i32_1 = arith.constant 0 : i32
    return %c0_i32, %c0_i32_0 : i32, i32
  }
  func.func @transform_3(%arg0: i32) -> (i32, i32) {
    %c0_i32 = arith.constant 0 : i32
    %c0_i32_0 = arith.constant 0 : i32
    %c0_i32_1 = arith.constant 0 : i32
    return %c0_i32, %c0_i32_0 : i32, i32
  }
  func.func @transform_4(%arg0: i32) -> (i32, i32, i32) {
    %c0_i32 = arith.constant 0 : i32
    %c0_i32_0 = arith.constant 0 : i32
    %c0_i32_1 = arith.constant 0 : i32
    return %arg0, %c0_i32, %c0_i32_0 : i32, i32, i32
  }
  func.func @transform_5(%arg0: i32) -> (i32, i32, i32) {
    %c0_i32 = arith.constant 0 : i32
    %c0_i32_0 = arith.constant 0 : i32
    %c0_i32_1 = arith.constant 0 : i32
    return %arg0, %c0_i32, %c0_i32_0 : i32, i32, i32
  }
}

module attributes {stable_mosaic.version = 11 : i64} {
  func.func @_bn_add_relu_kernel(%arg0: i32, %arg1: memref<3x16x128xbf16, #tpu.memory_space<vmem>>, %arg2: memref<1x128xf32, #tpu.memory_space<vmem>>, %arg3: memref<1x128xf32, #tpu.memory_space<vmem>>, %arg4: memref<3x16x128xbf16, #tpu.memory_space<vmem>>, %arg5: memref<3x16x128xf32, #tpu.memory_space<vmem>>) attributes {dimension_semantics = [#tpu.dimension_semantics<parallel>], iteration_bounds = array<i64: 2>, scalar_prefetch = 0 : i64, scratch_operands = 0 : i64, tpu.core_type = #tpu.core_type<tc>, window_params = [{transform_indices = @transform_0, window_bounds = array<i64: 3, 16, 128>}, {pipeline_mode = #tpu.pipeline_mode<synchronous>, transform_indices = @transform_1, window_bounds = array<i64: 1, 128>}, {pipeline_mode = #tpu.pipeline_mode<synchronous>, transform_indices = @transform_2, window_bounds = array<i64: 1, 128>}, {transform_indices = @transform_3, window_bounds = array<i64: 3, 16, 128>}, {transform_indices = @transform_4, window_bounds = array<i64: 3, 16, 128>}]} {
    %c0 = arith.constant 0 : index
    %c0_0 = arith.constant 0 : index
    %c0_1 = arith.constant 0 : index
    %0 = vector.load %arg1[%c0, %c0_0, %c0_1] : memref<3x16x128xbf16, #tpu.memory_space<vmem>>, vector<3x16x128xbf16>
    %1 = arith.extf %0 : vector<3x16x128xbf16> to vector<3x16x128xf32>
    %c0_2 = arith.constant 0 : index
    %c0_3 = arith.constant 0 : index
    %c0_4 = arith.constant 0 : index
    %2 = vector.load %arg4[%c0_2, %c0_3, %c0_4] : memref<3x16x128xbf16, #tpu.memory_space<vmem>>, vector<3x16x128xbf16>
    %3 = arith.extf %2 : vector<3x16x128xbf16> to vector<3x16x128xf32>
    %c0_5 = arith.constant 0 : index
    %c0_6 = arith.constant 0 : index
    %4 = vector.load %arg2[%c0_5, %c0_6] : memref<1x128xf32, #tpu.memory_space<vmem>>, vector<1x128xf32>
    %5 = vector.shape_cast %4 : vector<1x128xf32> to vector<1x1x128xf32>
    %6 = vector.broadcast %5 : vector<1x1x128xf32> to vector<3x16x128xf32>
    %7 = arith.mulf %1, %6 : vector<3x16x128xf32>
    %c0_7 = arith.constant 0 : index
    %c0_8 = arith.constant 0 : index
    %8 = vector.load %arg3[%c0_7, %c0_8] : memref<1x128xf32, #tpu.memory_space<vmem>>, vector<1x128xf32>
    %9 = vector.shape_cast %8 : vector<1x128xf32> to vector<1x1x128xf32>
    %10 = vector.broadcast %9 : vector<1x1x128xf32> to vector<3x16x128xf32>
    %11 = arith.addf %7, %10 : vector<3x16x128xf32>
    %12 = arith.addf %11, %3 : vector<3x16x128xf32>
    %cst = arith.constant 0.000000e+00 : f32
    %13 = vector.broadcast %cst : f32 to vector<3x16x128xf32>
    %14 = arith.maximumf %12, %13 : vector<3x16x128xf32>
    %c0_9 = arith.constant 0 : index
    %c0_10 = arith.constant 0 : index
    %c0_11 = arith.constant 0 : index
    %15 = vector.load %arg5[%c0_9, %c0_10, %c0_11] : memref<3x16x128xf32, #tpu.memory_space<vmem>>, vector<3x16x128xf32>
    tpu.vector_store %arg5[%c0_9, %c0_10, %c0_11], %14 {strides = array<i32>} : memref<3x16x128xf32, #tpu.memory_space<vmem>>, vector<3x16x128xf32>,
    return
  }
  func.func @transform_0(%arg0: i32) -> (i32, i32, i32) {
    %c0_i32 = arith.constant 0 : i32
    %c0_i32_0 = arith.constant 0 : i32
    %c0_i32_1 = arith.constant 0 : i32
    return %arg0, %c0_i32, %c0_i32_0 : i32, i32, i32
  }
  func.func @transform_1(%arg0: i32) -> (i32, i32) {
    %c0_i32 = arith.constant 0 : i32
    %c0_i32_0 = arith.constant 0 : i32
    %c0_i32_1 = arith.constant 0 : i32
    return %c0_i32, %c0_i32_0 : i32, i32
  }
  func.func @transform_2(%arg0: i32) -> (i32, i32) {
    %c0_i32 = arith.constant 0 : i32
    %c0_i32_0 = arith.constant 0 : i32
    %c0_i32_1 = arith.constant 0 : i32
    return %c0_i32, %c0_i32_0 : i32, i32
  }
  func.func @transform_3(%arg0: i32) -> (i32, i32, i32) {
    %c0_i32 = arith.constant 0 : i32
    %c0_i32_0 = arith.constant 0 : i32
    %c0_i32_1 = arith.constant 0 : i32
    return %arg0, %c0_i32, %c0_i32_0 : i32, i32, i32
  }
  func.func @transform_4(%arg0: i32) -> (i32, i32, i32) {
    %c0_i32 = arith.constant 0 : i32
    %c0_i32_0 = arith.constant 0 : i32
    %c0_i32_1 = arith.constant 0 : i32
    return %arg0, %c0_i32, %c0_i32_0 : i32, i32, i32
  }
}

</mosaic_0001>

<llo_original>
// kernel: tile.23
$region0: #{tile.23}
  #allocation0 [shape = 's32[1]{0}', space=sflag, size = 0x4, scoped, tag = 'scoped memory for tile.23']
  %s0 = inlined_call_operand.vmem [shape: f32[8], index: 0, kind: input, shape index: {}]
  %s1 = inlined_call_operand.vmem [shape: f32[16,8], index: 1, kind: output, shape index: {}]
  // Predicated region
  $region2: #{tile.23} parent=0 // pred_check
    _
  $region3: #{tile.23} parent=0 // pred_check_branch
    %3 = sbr.rel (0) target = $region5
  $region4: #{tile.23} parent=0 // pred_region
    _
  $region5: #{tile.23} parent=0 // pred_fallthru
    _
  %v4 = vld [vmem:[%s0] ss:$0 sm:$0xff]
  %5 = vst [vmem:[%s1] sm:$0xff] %v4
  %s6 = scalar_lea.vmem %s1, 8
  %7 = vst [vmem:[%s6] sm:$0xff] %v4

// kernel: tile.24
$region0: #{tile.24}
  %s0 = inlined_call_operand.vmem [shape: f32[16,8], index: 0, kind: input, shape index: {}]
  %s1 = inlined_call_operand.vmem [shape: f32[1,128], index: 1, kind: output, shape index: {}]
  $region1: #{tile.24} parent=0
    #allocation0 [shape = 'u8[4096]{0}', space=vmem, size = 0x1000, scoped, tag = 'scoped mem for output reshape']
    %v2 = vld [vmem:[%s0] sm:$0x1]
    %vm3 = vcmask 64512
    %4 = vst.msk [vmem:[#allocation0] sm:$0x1] %vm3, %v2
    %s5 = scalar_lea.vmem %s0, 15
    %v6 = vld [vmem:[%s5] sm:$0x1]
    %7 = vrot.lane.b32.xlu0 %v6, 120
    %v8 = vpop.permute.xlu0 %7
    %vm9 = vcmask 1048512
    %10 = vst.msk [vmem:[#allocation0] sm:$0x1] %vm9, %v8
    %s11 = scalar_lea.vmem %s0, 14
    %v12 = vld [vmem:[%s11] sm:$0x1]
    %13 = vrot.lane.b32.xlu0 %v12, 112
    %v14 = vpop.permute.xlu0 %13
    %vm15 = vcmask 982912
    %16 = vst.msk [vmem:[#allocation0] sm:$0x1] %vm15, %v14
    %s17 = scalar_lea.vmem %s0, 13
    %v18 = vld [vmem:[%s17] sm:$0x1]
    %19 = vrot.lane.b32.xlu0 %v18, 104
    %v20 = vpop.permute.xlu0 %19
    %vm21 = vcmask 917312
    %22 = vst.msk [vmem:[#allocation0] sm:$0x1] %vm21, %v20
    %s23 = scalar_lea.vmem %s0, 12
    %v24 = vld [vmem:[%s23] sm:$0x1]
    %25 = vrot.lane.b32.xlu0 %v24, 96
    %v26 = vpop.permute.xlu0 %25
    %vm27 = vcmask 851712
    %28 = vst.msk [vmem:[#allocation0] sm:$0x1] %vm27, %v26
    %s29 = scalar_lea.vmem %s0, 11
    %v30 = vld [vmem:[%s29] sm:$0x1]
    %31 = vrot.lane.b32.xlu0 %v30, 88
    %v32 = vpop.permute.xlu0 %31
    %vm33 = vcmask 786112
    %34 = vst.msk [vmem:[#allocation0] sm:$0x1] %vm33, %v32
    %s35 = scalar_lea.vmem %s0, 10
    %v36 = vld [vmem:[%s35] sm:$0x1]
    %37 = vrot.lane.b32.xlu0 %v36, 80
    %v38 = vpop.permute.xlu0 %37
    %vm39 = vcmask 720512
    %40 = vst.msk [vmem:[#allocation0] sm:$0x1] %vm39, %v38
    %s41 = scalar_lea.vmem %s0, 9
    %v42 = vld [vmem:[%s41] sm:$0x1]
    %43 = vrot.lane.b32.xlu0 %v42, 72
    %v44 = vpop.permute.xlu0 %43
    %vm45 = vcmask 654912
    %46 = vst.msk [vmem:[#allocation0] sm:$0x1] %vm45, %v44
    %s47 = scalar_lea.vmem %s0, 8
    %v48 = vld [vmem:[%s47] sm:$0x1]
    %49 = vrot.lane.b32.xlu0 %v48, 64
    %v50 = vpop.permute.xlu0 %49
    %vm51 = vcmask 589312
    %52 = vst.msk [vmem:[#allocation0] sm:$0x1] %vm51, %v50
    %s53 = scalar_lea.vmem %s0, 7
    %v54 = vld [vmem:[%s53] sm:$0x1]
    %55 = vrot.lane.b32.xlu0 %v54, 56
    %v56 = vpop.permute.xlu0 %55
    %vm57 = vcmask 523712
    %58 = vst.msk [vmem:[#allocation0] sm:$0x1] %vm57, %v56
    %s59 = scalar_lea.vmem %s0, 6
    %v60 = vld [vmem:[%s59] sm:$0x1]
    %61 = vrot.lane.b32.xlu0 %v60, 48
    %v62 = vpop.permute.xlu0 %61
    %vm63 = vcmask 458112
    %64 = vst.msk [vmem:[#allocation0] sm:$0x1] %vm63, %v62
    %s65 = scalar_lea.vmem %s0, 5
    %v66 = vld [vmem:[%s65] sm:$0x1]
    %67 = vrot.lane.b32.xlu0 %v66, 40
    %v68 = vpop.permute.xlu0 %67
    %vm69 = vcmask 392512
    %70 = vst.msk [vmem:[#allocation0] sm:$0x1] %vm69, %v68
    %s71 = scalar_lea.vmem %s0, 4
    %v72 = vld [vmem:[%s71] sm:$0x1]
    %73 = vrot.lane.b32.xlu0 %v72, 32
    %v74 = vpop.permute.xlu0 %73
    %vm75 = vcmask 326912
    %76 = vst.msk [vmem:[#allocation0] sm:$0x1] %vm75, %v74
    %s77 = scalar_lea.vmem %s0, 3
    %v78 = vld [vmem:[%s77] sm:$0x1]
    %79 = vrot.lane.b32.xlu0 %v78, 24
    %v80 = vpop.permute.xlu0 %79
    %vm81 = vcmask 261312
    %82 = vst.msk [vmem:[#allocation0] sm:$0x1] %vm81, %v80
    %s83 = scalar_lea.vmem %s0, 2
    %v84 = vld [vmem:[%s83] sm:$0x1]
    %85 = vrot.lane.b32.xlu0 %v84, 16
    %v86 = vpop.permute.xlu0 %85
    %vm87 = vcmask 195712
    %88 = vst.msk [vmem:[#allocation0] sm:$0x1] %vm87, %v86
    %s89 = scalar_lea.vmem %s0, 1
    %v90 = vld [vmem:[%s89] sm:$0x1]
    %91 = vrot.lane.b32.xlu0 %v90, 8
    %v92 = vpop.permute.xlu0 %91
    %vm93 = vcmask 130112
    %94 = vst.msk [vmem:[#allocation0] sm:$0x1] %vm93, %v92
    %s96 = sshllo.u32 0, 1
    %v98 = vld [vmem:[#allocation0] sm:%s96]
    %s99 = sshllo.u32 0, 1
    %100 = vst [vmem:[%s1] sm:%s99] %v98

// kernel: basic_block_forward.3
$region0: #{basic_block_forward.3}
  #allocation0 [shape = 'u32[]', space=smem, size = 0x4, offset = 0x4, fixed_abs, tag = 'smem constant byte address 0x4 - core index']
  #allocation1 [shape = 'u32[144,128]{1,0:T(1,128)}', space=vmem, size = 0x12000, scoped, tag = 'internal scratch']
  %s0 = inlined_call_operand.vmem [shape: bf16[6,16,128], index: 0, kind: input, shape index: {}]
  %s1 = inlined_call_operand.vmem [shape: bf16[3,128,128], index: 1, kind: input, shape index: {}]
  %s2 = inlined_call_operand.vmem [shape: f32[1,128], index: 2, kind: input, shape index: {}]
  %s3 = inlined_call_operand.vmem [shape: f32[1,128], index: 3, kind: input, shape index: {}]
  %s4 = inlined_call_operand.vmem [shape: bf16[6,16,128], index: 4, kind: output, shape index: {0}]
  %s5 = inlined_call_operand.vmem [shape: f32[2,2,128], index: 5, kind: output, shape index: {1}]
  %6 = xla_tuple %s4, %s5
  %s7 = sld [smem:[#allocation0]]
  $region57: #{basic_block_forward.3} parent=0
    _
  %s9 = ssub.s32 1, %s7
  %s10 = scalar_select 0, %s9, %s7
  loop: start=0, step=1, limit=4
  $region2: #{basic_block_forward.3} parent=0 // loop_pre_header
    _
  $region3: #{basic_block_forward.3} parent=0 // loop_header
    %s12 = sphi 0, %s16
    %p13 = scmp.ge.s32.totalorder %s12, 4
    %s22 = sphi 0, %s24
    %s25 = sphi 0, %s22
    %s26 = sphi 0, %s25
    %s42 = sphi 0, %s26
    %s46 = sphi 0, %s46
    %s48 = sphi 0, %s46
    %s49 = sphi 0, %s48
    %s63 = sphi 0, %s49
    %s67 = sphi 0, %s67
    %s69 = sphi 0, %s67
    %s70 = sphi 0, %s69
    %s84 = sphi 0, %s70
    %s88 = sphi 0, %s88
    %s90 = sphi 0, %s88
    %s91 = sphi 0, %s90
    %s105 = sphi 0, %s91
    %s111 = sphi 0, %s113
    %s114 = sphi 0, %s111
    %s115 = sphi 0, %s114
    %s131 = sphi 0, %s115
    %s137 = sphi 0, %s139
    %s140 = sphi 0, %s137
    %s141 = sphi 0, %s140
    %s157 = sphi 0, %s141
  $region4: #{basic_block_forward.3} parent=0 // loop_header_branch
    %15 = sbr.rel (%p13) target = $region8
  $region5: #{basic_block_forward.3} parent=0 // loop_body
    %s17 = ssub.s32 %s12, 1
    %s18 = ssub.s32 %s12, 2
    %s19 = sadd.s32 %s12, 1
    %s20 = ssub.s32 %s12, %s19
    %p21 = scmp.eq.s32.totalorder %s20, 0
    %s23 = sadd.s32 %s22, 1
    %s24 = scalar_select %p21, %s22, %s23
    %p27 = pneg %p21
    %p28 = scmp.eq.s32.totalorder %s12, 1
    %p29 = por %p27, %p28
    %p30 = scmp.ne.s32.totalorder %s22, %s25
    %p31 = scmp.eq.s32.totalorder %s12, 0
    %p32 = por %p30, %p31
    %p33 = scmp.ne.s32.totalorder %s22, %s25
    %p34 = scmp.eq.s32.totalorder %s17, 1
    %p35 = por %p33, %p34
    %p36 = scmp.ne.s32.totalorder %s25, %s26
    %p37 = scmp.eq.s32.totalorder %s17, 0
    %p38 = por %p36, %p37
    %p39 = scmp.ne.s32.totalorder %s25, %s26
    %p40 = scmp.eq.s32.totalorder %s18, 1
    %p41 = por %p39, %p40
    %p43 = scmp.ne.s32.totalorder %s26, %s42
    %p44 = scmp.eq.s32.totalorder %s18, 0
    %p45 = por %p43, %p44
    %s47 = sadd.s32 %s46, 1
    %p50 = scmp.eq.s32.totalorder %s12, 1
    %p51 = scmp.ne.s32.totalorder %s46, %s48
    %p52 = scmp.eq.s32.totalorder %s12, 0
    %p53 = por %p51, %p52
    %p54 = scmp.ne.s32.totalorder %s46, %s48
    %p55 = scmp.eq.s32.totalorder %s17, 1
    %p56 = por %p54, %p55
    %p57 = scmp.ne.s32.totalorder %s48, %s49
    %p58 = scmp.eq.s32.totalorder %s17, 0
    %p59 = por %p57, %p58
    %p60 = scmp.ne.s32.totalorder %s48, %s49
    %p61 = scmp.eq.s32.totalorder %s18, 1
    %p62 = por %p60, %p61
    %p64 = scmp.ne.s32.totalorder %s49, %s63
    %p65 = scmp.eq.s32.totalorder %s18, 0
    %p66 = por %p64, %p65
    %s68 = sadd.s32 %s67, 1
    %p71 = scmp.eq.s32.totalorder %s12, 1
    %p72 = scmp.ne.s32.totalorder %s67, %s69
    %p73 = scmp.eq.s32.totalorder %s12, 0
    %p74 = por %p72, %p73
    %p75 = scmp.ne.s32.totalorder %s67, %s69
    %p76 = scmp.eq.s32.totalorder %s17, 1
    %p77 = por %p75, %p76
    %p78 = scmp.ne.s32.totalorder %s69, %s70
    %p79 = scmp.eq.s32.totalorder %s17, 0
    %p80 = por %p78, %p79
    %p81 = scmp.ne.s32.totalorder %s69, %s70
    %p82 = scmp.eq.s32.totalorder %s18, 1
    %p83 = por %p81, %p82
    %p85 = scmp.ne.s32.totalorder %s70, %s84
    %p86 = scmp.eq.s32.totalorder %s18, 0
    %p87 = por %p85, %p86
    %s89 = sadd.s32 %s88, 1
    %p92 = scmp.eq.s32.totalorder %s12, 1
    %p93 = scmp.ne.s32.totalorder %s88, %s90
    %p94 = scmp.eq.s32.totalorder %s12, 0
    %p95 = por %p93, %p94
    %p96 = scmp.ne.s32.totalorder %s88, %s90
    %p97 = scmp.eq.s32.totalorder %s17, 1
    %p98 = por %p96, %p97
    %p99 = scmp.ne.s32.totalorder %s90, %s91
    %p100 = scmp.eq.s32.totalorder %s17, 0
    %p101 = por %p99, %p100
    %p102 = scmp.ne.s32.totalorder %s90, %s91
    %p103 = scmp.eq.s32.totalorder %s18, 1
    %p104 = por %p102, %p103
    %p106 = scmp.ne.s32.totalorder %s91, %s105
    %p107 = scmp.eq.s32.totalorder %s18, 0
    %p108 = por %p106, %p107
    %s109 = ssub.s32 %s12, %s19
    %p110 = scmp.eq.s32.totalorder %s109, 0
    %s112 = sadd.s32 %s111, 1
    %s113 = scalar_select %p110, %s111, %s112
    %p116 = pneg %p110
    %p117 = scmp.eq.s32.totalorder %s12, 1
    %p118 = por %p116, %p117
    %p119 = scmp.ne.s32.totalorder %s111, %s114
    %p120 = scmp.eq.s32.totalorder %s12, 0
    %p121 = por %p119, %p120
    %p122 = scmp.ne.s32.totalorder %s111, %s114
    %p123 = scmp.eq.s32.totalorder %s17, 1
    %p124 = por %p122, %p123
    %p125 = scmp.ne.s32.totalorder %s114, %s115
    %p126 = scmp.eq.s32.totalorder %s17, 0
    %p127 = por %p125, %p126
    %p128 = scmp.ne.s32.totalorder %s114, %s115
    %p129 = scmp.eq.s32.totalorder %s18, 1
    %p130 = por %p128, %p129
    %p132 = scmp.ne.s32.totalorder %s115, %s131
    %p133 = scmp.eq.s32.totalorder %s18, 0
    %p134 = por %p132, %p133
    %s135 = ssub.s32 %s12, %s19
    %p136 = scmp.eq.s32.totalorder %s135, 0
    %s138 = sadd.s32 %s137, 1
    %s139 = scalar_select %p136, %s137, %s138
    %p142 = pneg %p136
    %p143 = scmp.eq.s32.totalorder %s12, 1
    %p144 = por %p142, %p143
    %p145 = scmp.ne.s32.totalorder %s137, %s140
    %p146 = scmp.eq.s32.totalorder %s12, 0
    %p147 = por %p145, %p146
    %p148 = scmp.ne.s32.totalorder %s137, %s140
    %p149 = scmp.eq.s32.totalorder %s17, 1
    %p150 = por %p148, %p149
    %p151 = scmp.ne.s32.totalorder %s140, %s141
    %p152 = scmp.eq.s32.totalorder %s17, 0
    %p153 = por %p151, %p152
    %p154 = scmp.ne.s32.totalorder %s140, %s141
    %p155 = scmp.eq.s32.totalorder %s18, 1
    %p156 = por %p154, %p155
    %p158 = scmp.ne.s32.totalorder %s141, %s157
    %p159 = scmp.eq.s32.totalorder %s18, 0
    %p160 = por %p158, %p159
    %p161 = scmp.le.s32.totalorder 1, %s12
    %p162 = scmp.lt.s32.totalorder %s12, 3
    %p163 = pnand %p161, %p162
    %p164 = pneg %p163
    // Predicated region
    $region9: #{basic_block_forward.3} parent=5 // pred_check
      _
    $region10: #{basic_block_forward.3} parent=5 // pred_check_branch
      %166 = sbr.rel (%p163) target = $region12
    $region11: #{basic_block_forward.3} parent=5 // pred_region
      %s167 = ssub.s32 %s12, 1
      // Predicated region
      $region13: #{basic_block_forward.3} parent=11 // pred_check
        %p168 = pneg %p59
      $region14: #{basic_block_forward.3} parent=11 // pred_check_branch
        %170 = sbr.rel (%p168) target = $region16
      $region15: #{basic_block_forward.3} parent=11 // pred_region
        _
      $region16: #{basic_block_forward.3} parent=11 // pred_fallthru
        _
      // Predicated region
      $region17: #{basic_block_forward.3} parent=11 // pred_check
        %p171 = pneg %p80
      $region18: #{basic_block_forward.3} parent=11 // pred_check_branch
        %173 = sbr.rel (%p171) target = $region20
      $region19: #{basic_block_forward.3} parent=11 // pred_region
        _
      $region20: #{basic_block_forward.3} parent=11 // pred_fallthru
        _
      // Predicated region
      $region21: #{basic_block_forward.3} parent=11 // pred_check
        %p174 = pneg %p101
      $region22: #{basic_block_forward.3} parent=11 // pred_check_branch
        %176 = sbr.rel (%p174) target = $region24
      $region23: #{basic_block_forward.3} parent=11 // pred_region
        _
      $region24: #{basic_block_forward.3} parent=11 // pred_fallthru
        _
    $region12: #{basic_block_forward.3} parent=5 // pred_fallthru
      _
    %p177 = scmp.lt.s32.totalorder %s12, 2
    // Predicated region
    $region25: #{basic_block_forward.3} parent=5 // pred_check
      %p178 = pneg %p177
    $region26: #{basic_block_forward.3} parent=5 // pred_check_branch
      %180 = sbr.rel (%p178) target = $region28
    $region27: #{basic_block_forward.3} parent=5 // pred_region
      // Predicated region
      $region29: #{basic_block_forward.3} parent=27 // pred_check
        %p181 = pneg %p32
      $region30: #{basic_block_forward.3} parent=27 // pred_check_branch
        %183 = sbr.rel (%p181) target = $region32
      $region31: #{basic_block_forward.3} parent=27 // pred_region
        %s184 = smul.u32 3, %s12
        %p185 = scmp.lt.s32.totalorder %s184, 5
        %s186 = scalar_select %p185, %s184, 5
        %s187 = smul.addr %s186, 2
        %s188 = smul.addr %s187, 4
        %s189 = scalar_lea.vmem %s0, %s188
        %s190 = smul.u32 3, %s12
      $region32: #{basic_block_forward.3} parent=27 // pred_fallthru
        _
    $region28: #{basic_block_forward.3} parent=5 // pred_fallthru
      _
    %p191 = scmp.le.s32.totalorder 1, %s12
    %p192 = scmp.lt.s32.totalorder %s12, 3
    %p193 = pnand %p191, %p192
    %p194 = pneg %p193
    // Predicated region
    $region33: #{basic_block_forward.3} parent=5 // pred_check
      _
    $region34: #{basic_block_forward.3} parent=5 // pred_check_branch
      %196 = sbr.rel (%p193) target = $region36
    $region35: #{basic_block_forward.3} parent=5 // pred_region
      %s197 = ssub.s32 %s12, 1
      %s198 = smul.u32 3, %s17
      %p199 = scmp.lt.s32.totalorder %s198, 5
      %s200 = scalar_select %p199, %s198, 5
      %s201 = smul.addr %s200, 2
      %s202 = smul.addr %s201, 4
      %s203 = scalar_lea.vmem %s0, %s202
      %p204 = pneg %p38
      %p205 = pneg %p35
      %p206 = pneg %p59
      %p207 = pneg %p56
      %p208 = pneg %p80
      %p209 = pneg %p77
      %p210 = pneg %p101
      %p211 = pneg %p98
      %p212 = pneg %p127
      %p213 = pneg %p124
      %s214 = smul.u32 3, %s17
      %p215 = scmp.lt.s32.totalorder %s214, 5
      %s216 = scalar_select %p215, %s214, 5
      %s217 = smul.addr %s216, 2
      %s218 = smul.addr %s217, 4
      %s219 = scalar_lea.vmem %s4, %s218
      %p220 = pneg %p153
      %p221 = pneg %p150
      %p222 = scmp.lt.s32.totalorder %s17, 1
      %s223 = scalar_select %p222, %s17, 1
      %s224 = smul.addr %s223, 2
      %s225 = scalar_lea.vmem %s5, %s224
      %s226 = smul.u32 3, %s17
      %p227 = scmp.lt.s32.totalorder %s226, 5
      %s228 = scalar_select %p227, %s226, 5
      %s229 = smul.addr %s228, 2
      %s230 = smul.addr %s229, 4
      %s231 = scalar_lea.vmem %s0, %s230
      %s232 = smul.u32 3, %s17
      %s233 = smul.u32 3, %s17
      %p234 = scmp.lt.s32.totalorder %s233, 5
      %s235 = scalar_select %p234, %s233, 5
      %s236 = smul.addr %s235, 2
      %s237 = smul.addr %s236, 4
      %s238 = scalar_lea.vmem %s4, %s237
      %s239 = smul.u32 3, %s17
      %p240 = scmp.lt.s32.totalorder %s17, 1
      %s241 = scalar_select %p240, %s17, 1
      %s242 = smul.addr %s241, 2
      %s243 = scalar_lea.vmem %s5, %s242
      %v247 = vld [vmem:[%s231] sm:$0xf]
      %v248 = vld [vmem:[%s231 + $0x4] sm:$0xf]
      %v249 = vld [vmem:[%s231 + $0x8] sm:$0xf]
      %v250 = vld [vmem:[%s231 + $0xc] sm:$0xf]
      %v251 = vld [vmem:[%s231 + $0x10] sm:$0xf]
      %v252 = vld [vmem:[%s231 + $0x14] sm:$0xf]
      %v253 = vlaneseq
      %v254 = vand.u32 %v253, 127
      %vm255 = vcmp.lt.s32.totalorder %v254, 0
      %v256 = vsub.s32 0, %v254
      %v257 = vsel %vm255, %v256, %v254
      %v258 = vshrl.u32 %v257, 3
      %v259 = vand.u32 %v257, 7
      %v260 = vsub.s32 0, %v259
      %v261 = vsel %vm255, %v260, %v259
      %vm262 = vcmp.ne.s32.totalorder %v261, 0
      %vm263 = vcmp.lt.s32.totalorder %v261, 0
      %vm264 = vmand %vm263, %vm262
      %v265 = vadd.s32 %v261, 8
      %v266 = vsel %vm264, %v265, %v261
      %v267 = vlaneseq
      %v268 = vshrl.u32 %v267, 7
      %v269 = vadd.s32 %v268, 8
      %v270 = vadd.s32 %v268, 16
      %v271 = vadd.s32 %v268, 24
      %v272 = vadd.s32 %v268, 32
      %v273 = vadd.s32 %v268, 40
      %vm274 = vcmp.lt.s32.totalorder %v268, 0
      %v275 = vsub.s32 0, %v268
      %v276 = vsel %vm274, %v275, %v268
      %v277 = vmul.u32.u64.compose %v276, 2863311531
      %v278 = vextract.low.u32 %v277
      %v279 = vextract.high.u32 %v277
      %v280 = vshrl.u32 %v279, 5
      %v281 = vmul.u32 %v280, 48
      %v282 = vsub.s32 %v276, %v281
      %v283 = vsub.s32 0, %v282
      %v284 = vsel %vm274, %v283, %v282
      %vm285 = vcmp.lt.s32.totalorder %v269, 0
      %v286 = vsub.s32 0, %v269
      %v287 = vsel %vm285, %v286, %v269
      %v288 = vmul.u32.u64.compose %v287, 2863311531
      %v289 = vextract.low.u32 %v288
      %v290 = vextract.high.u32 %v288
      %v291 = vshrl.u32 %v290, 5
      %v292 = vmul.u32 %v291, 48
      %v293 = vsub.s32 %v287, %v292
      %v294 = vsub.s32 0, %v293
      %v295 = vsel %vm285, %v294, %v293
      %vm296 = vcmp.lt.s32.totalorder %v270, 0
      %v297 = vsub.s32 0, %v270
      %v298 = vsel %vm296, %v297, %v270
      %v299 = vmul.u32.u64.compose %v298, 2863311531
      %v300 = vextract.low.u32 %v299
      %v301 = vextract.high.u32 %v299
      %v302 = vshrl.u32 %v301, 5
      %v303 = vmul.u32 %v302, 48
      %v304 = vsub.s32 %v298, %v303
      %v305 = vsub.s32 0, %v304
      %v306 = vsel %vm296, %v305, %v304
      %vm307 = vcmp.lt.s32.totalorder %v271, 0
      %v308 = vsub.s32 0, %v271
      %v309 = vsel %vm307, %v308, %v271
      %v310 = vmul.u32.u64.compose %v309, 2863311531
      %v311 = vextract.low.u32 %v310
      %v312 = vextract.high.u32 %v310
      %v313 = vshrl.u32 %v312, 5
      %v314 = vmul.u32 %v313, 48
      %v315 = vsub.s32 %v309, %v314
      %v316 = vsub.s32 0, %v315
      %v317 = vsel %vm307, %v316, %v315
      %vm318 = vcmp.lt.s32.totalorder %v272, 0
      %v319 = vsub.s32 0, %v272
      %v320 = vsel %vm318, %v319, %v272
      %v321 = vmul.u32.u64.compose %v320, 2863311531
      %v322 = vextract.low.u32 %v321
      %v323 = vextract.high.u32 %v321
      %v324 = vshrl.u32 %v323, 5
      %v325 = vmul.u32 %v324, 48
      %v326 = vsub.s32 %v320, %v325
      %v327 = vsub.s32 0, %v326
      %v328 = vsel %vm318, %v327, %v326
      %vm329 = vcmp.lt.s32.totalorder %v273, 0
      %v330 = vsub.s32 0, %v273
      %v331 = vsel %vm329, %v330, %v273
      %v332 = vmul.u32.u64.compose %v331, 2863311531
      %v333 = vextract.low.u32 %v332
      %v334 = vextract.high.u32 %v332
      %v335 = vshrl.u32 %v334, 5
      %v336 = vmul.u32 %v335, 48
      %v337 = vsub.s32 %v331, %v336
      %v338 = vsub.s32 0, %v337
      %v339 = vsel %vm329, %v338, %v337
      %vm340 = vcmp.ne.s32.totalorder %v284, 0
      %vm341 = vcmp.ne.s32.totalorder %v295, 0
      %vm342 = vcmp.ne.s32.totalorder %v306, 0
      %vm343 = vcmp.ne.s32.totalorder %v317, 0
      %vm344 = vcmp.ne.s32.totalorder %v328, 0
      %vm345 = vcmp.ne.s32.totalorder %v339, 0
      %vm346 = vcmp.lt.s32.totalorder %v284, 0
      %vm347 = vcmp.lt.s32.totalorder %v295, 0
      %vm348 = vcmp.lt.s32.totalorder %v306, 0
      %vm349 = vcmp.lt.s32.totalorder %v317, 0
      %vm350 = vcmp.lt.s32.totalorder %v328, 0
      %vm351 = vcmp.lt.s32.totalorder %v339, 0
      %vm352 = vmand %vm346, %vm340
      %vm353 = vmand %vm347, %vm341
      %vm354 = vmand %vm348, %vm342
      %vm355 = vmand %vm349, %vm343
      %vm356 = vmand %vm350, %vm344
      %vm357 = vmand %vm351, %vm345
      %v358 = vadd.s32 %v284, 48
      %v359 = vadd.s32 %v295, 48
      %v360 = vadd.s32 %v306, 48
      %v361 = vadd.s32 %v317, 48
      %v362 = vadd.s32 %v328, 48
      %v363 = vadd.s32 %v339, 48
      %v364 = vsel %vm352, %v358, %v284
      %v365 = vsel %vm353, %v359, %v295
      %v366 = vsel %vm354, %v360, %v306
      %v367 = vsel %vm355, %v361, %v317
      %v368 = vsel %vm356, %v362, %v328
      %v369 = vsel %vm357, %v363, %v339
      %v374 = vunpack.c.l.b16 %v247
      %v375 = vunpack.c.l.b16 %v248
      %v376 = vunpack.c.l.b16 %v249
      %v377 = vunpack.c.l.b16 %v250
      %v378 = vpack.c.b16 %v375, %v374
      %v379 = vpack.c.b16 %v377, %v376
      %v384 = vunpack.c.l.b16 %v251
      %v385 = vunpack.c.l.b16 %v252
      %v386 = vpack.c.b16 %v385, %v384
      %vm388 = vcmp.ge.s32.totalorder %v366, 16
      %vm389 = vcmp.ge.s32.totalorder %v367, 16
      %vm390 = vcmp.ge.s32.totalorder %v368, 16
      %vm391 = vcmp.ge.s32.totalorder %v369, 16
      %vm392 = vmpackc.low %vm388, %vm388
      %vm393 = vmpackc.low %vm389, %vm389
      %vm394 = vmpackc.low %vm390, %vm390
      %vm395 = vmpackc.low %vm391, %vm391
      %v396 = vsel %vm392, 65537, 0
      %v397 = vsel %vm393, 65537, 0
      %v398 = vsel %vm394, 65537, 0
      %v399 = vsel %vm395, 65537, 0
      %v400 = vunpack.c.l.b16 %v396
      %v401 = vunpack.c.l.b16 %v397
      %v402 = vunpack.c.l.b16 %v398
      %v403 = vunpack.c.l.b16 %v399
      %v404 = vpack.c.b16 %v401, %v400
      %v405 = vpack.c.b16 %v403, %v402
      %vm406 = vcmp.ne.s16.totalorder %v404, 0
      %vm407 = vcmp.ne.s16.totalorder %v405, 0
      %v408 = vsel %vm406, %v378, 0
      %v409 = vsel %vm407, %v379, 0
      %vm410 = vcmp.lt.s32.totalorder %v364, 32
      %vm411 = vcmp.lt.s32.totalorder %v365, 32
      %vm412 = vcmp.lt.s32.totalorder %v366, 32
      %vm413 = vcmp.lt.s32.totalorder %v367, 32
      %vm414 = vmpackc.low %vm410, %vm410
      %vm415 = vmpackc.low %vm411, %vm411
      %vm416 = vmpackc.low %vm412, %vm412
      %vm417 = vmpackc.low %vm413, %vm413
      %v418 = vsel %vm414, 65537, 0
      %v419 = vsel %vm415, 65537, 0
      %v420 = vsel %vm416, 65537, 0
      %v421 = vsel %vm417, 65537, 0
      %v422 = vunpack.c.l.b16 %v418
      %v423 = vunpack.c.l.b16 %v419
      %v424 = vunpack.c.l.b16 %v420
      %v425 = vunpack.c.l.b16 %v421
      %v426 = vpack.c.b16 %v423, %v422
      %v427 = vpack.c.b16 %v425, %v424
      %vm428 = vcmp.ne.s16.totalorder %v426, 0
      %vm429 = vcmp.ne.s16.totalorder %v427, 0
      %v430 = vsel %vm428, %v379, 0
      %v431 = vsel %vm429, %v386, 0
      %vm432 = vcmp.lt.s32.totalorder %v266, 2
      %vm433 = vcmp.lt.s32.totalorder %v266, 4
      %vm434 = vmpackc.low %vm433, %vm433
      %v435 = vsel %vm434, 65537, 0
      %v436 = vlaneseq
      %v437 = vshrl.u32 %v436, 7
      %v438 = vsub.s32 0, %v437
      %v439 = vrot.slane %v435, %v438
      %vm440 = vcmp.ne.s16.totalorder %v439, 0
      %v441 = vsel %vm440, %v430, %v378
      %v442 = vsel %vm440, %v431, %v379
      %v443 = vsel %vm440, 0, %v386
      %vm444 = vmpackc.low %vm432, %vm432
      %v445 = vsel %vm444, 65537, 0
      %v446 = vlaneseq
      %v447 = vshrl.u32 %v446, 7
      %v448 = vsub.s32 0, %v447
      %v449 = vrot.slane %v445, %v448
      %vm450 = vcmp.ne.s16.totalorder %v449, 0
      %v451 = vsel %vm450, 0, %v441
      %v452 = vsel %vm450, %v408, %v442
      %v453 = vsel %vm450, %v409, %v443
      %v454 = vld [vmem:[%s1] sm:$0xf]
      %v455 = vld [vmem:[%s1 + $0x4] sm:$0xf]
      %v456 = vld [vmem:[%s1 + $0x8] sm:$0xf]
      %v457 = vld [vmem:[%s1 + $0xc] sm:$0xf]
      %v458 = vld [vmem:[%s1 + $0x10] sm:$0xf]
      %v459 = vld [vmem:[%s1 + $0x14] sm:$0xf]
      %v460 = vld [vmem:[%s1 + $0x18] sm:$0xf]
      %v461 = vld [vmem:[%s1 + $0x1c] sm:$0xf]
      %v462 = vld [vmem:[%s1 + $0x20] sm:$0xf]
      %v463 = vld [vmem:[%s1 + $0x24] sm:$0xf]
      %v464 = vld [vmem:[%s1 + $0x28] sm:$0xf]
      %v465 = vld [vmem:[%s1 + $0x2c] sm:$0xf]
      %v466 = vld [vmem:[%s1 + $0x30] sm:$0xf]
      %v467 = vld [vmem:[%s1 + $0x34] sm:$0xf]
      %v468 = vld [vmem:[%s1 + $0x38] sm:$0xf]
      %v469 = vld [vmem:[%s1 + $0x3c] sm:$0xf]
      %v486 = vunpack.c.l.b16 %v454
      %v487 = vunpack.c.l.b16 %v455
      %v488 = vunpack.c.l.b16 %v456
      %v489 = vunpack.c.l.b16 %v457
      %v490 = vunpack.c.l.b16 %v458
      %v491 = vunpack.c.l.b16 %v459
      %v492 = vunpack.c.l.b16 %v460
      %v493 = vunpack.c.l.b16 %v461
      %v494 = vunpack.c.l.b16 %v462
      %v495 = vunpack.c.l.b16 %v463
      %v496 = vunpack.c.l.b16 %v464
      %v497 = vunpack.c.l.b16 %v465
      %v498 = vunpack.c.l.b16 %v466
      %v499 = vunpack.c.l.b16 %v467
      %v500 = vunpack.c.l.b16 %v468
      %v501 = vunpack.c.l.b16 %v469
      %v502 = vpack.c.b16 %v487, %v486
      %v503 = vpack.c.b16 %v489, %v488
      %v504 = vpack.c.b16 %v491, %v490
      %v505 = vpack.c.b16 %v493, %v492
      %v506 = vpack.c.b16 %v495, %v494
      %v507 = vpack.c.b16 %v497, %v496
      %v508 = vpack.c.b16 %v499, %v498
      %v509 = vpack.c.b16 %v501, %v500
      %518 = vmatprep.subr.bf16.mxu0 0
      %519 = vmatpush1.bf16.msra.mxu0 %v502
      %520 = vmatprep.subr.bf16.mxu0 0
      %521 = vmatpush1.bf16.msra.mxu0 %v503
      %522 = vmatprep.subr.bf16.mxu0 0
      %523 = vmatpush1.bf16.msra.mxu0 %v504
      %524 = vmatprep.subr.bf16.mxu0 0
      %525 = vmatpush1.bf16.msra.mxu0 %v505
      %526 = vmatprep.subr.bf16.mxu0 0
      %527 = vmatpush1.bf16.msra.mxu0 %v506
      %528 = vmatprep.subr.bf16.mxu0 0
      %529 = vmatpush1.bf16.msra.mxu0 %v507
      %530 = vmatprep.subr.bf16.mxu0 0
      %531 = vmatpush1.bf16.msra.mxu0 %v508
      %532 = vmatprep.subr.bf16.mxu0 0
      %533 = vmatpush1.bf16.msra.mxu0 %v509
      %534 = vmatprep.subr.bf16.mxu0 0
      %535 = vmatpush1.bf16.msra.mxu0 0
      %536 = vmatprep.subr.bf16.mxu0 0
      %537 = vmatpush1.bf16.msra.mxu0 0
      %538 = vmatprep.subr.bf16.mxu0 0
      %539 = vmatpush1.bf16.msra.mxu0 0
      %540 = vmatprep.subr.bf16.mxu0 0
      %541 = vmatpush1.bf16.msra.mxu0 0
      %542 = vmatprep.subr.bf16.mxu0 0
      %543 = vmatpush1.bf16.msra.mxu0 0
      %544 = vmatprep.subr.bf16.mxu0 0
      %545 = vmatpush1.bf16.msra.mxu0 0
      %546 = vmatprep.subr.bf16.mxu0 0
      %547 = vmatpush1.bf16.msra.mxu0 0
      %548 = vmatprep.subr.bf16.mxu0 0
      %549 = vmatpush1.bf16.msra.mxu0 0
      %550 = vmatprep.mubr.bf16.mxu0 0
      %551 = vmatmul.mubr.bf16.gmra.mrb[0].mxu0 %v451
      %v552 = vpop.f32.mrb[0].mxu0
      %v553 = vadd.f32 0.0, %v552
      %v554 = vpop.f32.mrb[0].mxu0
      %v555 = vpop.f32.mrb[0].mxu0
      %v556 = vadd.f32 0.0, %v555
      %v557 = vpop.f32.mrb[0].mxu0
      %558 = vmatprep.mubr.bf16.mxu0 0
      %559 = vmatmul.mubr.bf16.gmra.mrb[0].mxu0 %v452
      %v560 = vpop.f32.mrb[0].mxu0
      %v561 = vadd.f32 0.0, %v560
      %v562 = vpop.f32.mrb[0].mxu0
      %v563 = vpop.f32.mrb[0].mxu0
      %v564 = vadd.f32 0.0, %v563
      %v565 = vpop.f32.mrb[0].mxu0
      %566 = vmatprep.mubr.bf16.mxu0 0
      %567 = vmatmul.mubr.bf16.gmra.mrb[0].mxu0 %v453
      %v568 = vpop.f32.mrb[0].mxu0
      %v569 = vadd.f32 0.0, %v568
      %v570 = vpop.f32.mrb[0].mxu0
      %v571 = vpop.f32.mrb[0].mxu0
      %v572 = vadd.f32 0.0, %v571
      %v573 = vpop.f32.mrb[0].mxu0
      %574 = vdwg.mxu0
      %s575 = scalar_lea.vmem %s1, 64
      %v576 = vld [vmem:[%s575] sm:$0xf]
      %v577 = vld [vmem:[%s575 + $0x4] sm:$0xf]
      %v578 = vld [vmem:[%s575 + $0x8] sm:$0xf]
      %v579 = vld [vmem:[%s575 + $0xc] sm:$0xf]
      %v580 = vld [vmem:[%s575 + $0x10] sm:$0xf]
      %v581 = vld [vmem:[%s575 + $0x14] sm:$0xf]
      %v582 = vld [vmem:[%s575 + $0x18] sm:$0xf]
      %v583 = vld [vmem:[%s575 + $0x1c] sm:$0xf]
      %v584 = vld [vmem:[%s575 + $0x20] sm:$0xf]
      %v585 = vld [vmem:[%s575 + $0x24] sm:$0xf]
      %v586 = vld [vmem:[%s575 + $0x28] sm:$0xf]
      %v587 = vld [vmem:[%s575 + $0x2c] sm:$0xf]
      %v588 = vld [vmem:[%s575 + $0x30] sm:$0xf]
      %v589 = vld [vmem:[%s575 + $0x34] sm:$0xf]
      %v590 = vld [vmem:[%s575 + $0x38] sm:$0xf]
      %v591 = vld [vmem:[%s575 + $0x3c] sm:$0xf]
      %s592 = scalar_lea.vmem %s1, 128
      %v593 = vld [vmem:[%s592] sm:$0xf]
      %v594 = vld [vmem:[%s592 + $0x4] sm:$0xf]
      %v595 = vld [vmem:[%s592 + $0x8] sm:$0xf]
      %v596 = vld [vmem:[%s592 + $0xc] sm:$0xf]
      %v597 = vld [vmem:[%s592 + $0x10] sm:$0xf]
      %v598 = vld [vmem:[%s592 + $0x14] sm:$0xf]
      %v599 = vld [vmem:[%s592 + $0x18] sm:$0xf]
      %v600 = vld [vmem:[%s592 + $0x1c] sm:$0xf]
      %v601 = vld [vmem:[%s592 + $0x20] sm:$0xf]
      %v602 = vld [vmem:[%s592 + $0x24] sm:$0xf]
      %v603 = vld [vmem:[%s592 + $0x28] sm:$0xf]
      %v604 = vld [vmem:[%s592 + $0x2c] sm:$0xf]
      %v605 = vld [vmem:[%s592 + $0x30] sm:$0xf]
      %v606 = vld [vmem:[%s592 + $0x34] sm:$0xf]
      %v607 = vld [vmem:[%s592 + $0x38] sm:$0xf]
      %v608 = vld [vmem:[%s592 + $0x3c] sm:$0xf]
      %v625 = vunpack.c.l.b16 %v593
      %v626 = vunpack.c.l.b16 %v594
      %v627 = vunpack.c.l.b16 %v595
      %v628 = vunpack.c.l.b16 %v596
      %v629 = vunpack.c.l.b16 %v597
      %v630 = vunpack.c.l.b16 %v598
      %v631 = vunpack.c.l.b16 %v599
      %v632 = vunpack.c.l.b16 %v600
      %v633 = vunpack.c.l.b16 %v601
      %v634 = vunpack.c.l.b16 %v602
      %v635 = vunpack.c.l.b16 %v603
      %v636 = vunpack.c.l.b16 %v604
      %v637 = vunpack.c.l.b16 %v605
      %v638 = vunpack.c.l.b16 %v606
      %v639 = vunpack.c.l.b16 %v607
      %v640 = vunpack.c.l.b16 %v608
      %v641 = vpack.c.b16 %v626, %v625
      %v642 = vpack.c.b16 %v628, %v627
      %v643 = vpack.c.b16 %v630, %v629
      %v644 = vpack.c.b16 %v632, %v631
      %v645 = vpack.c.b16 %v634, %v633
      %v646 = vpack.c.b16 %v636, %v635
      %v647 = vpack.c.b16 %v638, %v637
      %v648 = vpack.c.b16 %v640, %v639
      %657 = vmatprep.subr.bf16.mxu0 0
      %658 = vmatpush1.bf16.msra.mxu0 %v641
      %659 = vmatprep.subr.bf16.mxu0 0
      %660 = vmatpush1.bf16.msra.mxu0 %v642
      %661 = vmatprep.subr.bf16.mxu0 0
      %662 = vmatpush1.bf16.msra.mxu0 %v643
      %663 = vmatprep.subr.bf16.mxu0 0
      %664 = vmatpush1.bf16.msra.mxu0 %v644
      %665 = vmatprep.subr.bf16.mxu0 0
      %666 = vmatpush1.bf16.msra.mxu0 %v645
      %667 = vmatprep.subr.bf16.mxu0 0
      %668 = vmatpush1.bf16.msra.mxu0 %v646
      %669 = vmatprep.subr.bf16.mxu0 0
      %670 = vmatpush1.bf16.msra.mxu0 %v647
      %671 = vmatprep.subr.bf16.mxu0 0
      %672 = vmatpush1.bf16.msra.mxu0 %v648
      %673 = vmatprep.subr.bf16.mxu0 0
      %674 = vmatpush1.bf16.msra.mxu0 0
      %675 = vmatprep.subr.bf16.mxu0 0
      %676 = vmatpush1.bf16.msra.mxu0 0
      %677 = vmatprep.subr.bf16.mxu0 0
      %678 = vmatpush1.bf16.msra.mxu0 0
      %679 = vmatprep.subr.bf16.mxu0 0
      %680 = vmatpush1.bf16.msra.mxu0 0
      %681 = vmatprep.subr.bf16.mxu0 0
      %682 = vmatpush1.bf16.msra.mxu0 0
      %683 = vmatprep.subr.bf16.mxu0 0
      %684 = vmatpush1.bf16.msra.mxu0 0
      %685 = vmatprep.subr.bf16.mxu0 0
      %686 = vmatpush1.bf16.msra.mxu0 0
      %687 = vmatprep.subr.bf16.mxu0 0
      %688 = vmatpush1.bf16.msra.mxu0 0
      %689 = vmatprep.mubr.bf16.mxu0 0
      %690 = vmatmul.mubr.bf16.gmra.mrb[0].mxu0 %v451
      %v691 = vpop.f32.mrb[0].mxu0
      %v692 = vadd.f32 0.0, %v691
      %v693 = vpop.f32.mrb[0].mxu0
      %v694 = vpop.f32.mrb[0].mxu0
      %v695 = vadd.f32 0.0, %v694
      %v696 = vpop.f32.mrb[0].mxu0
      %697 = vmatprep.mubr.bf16.mxu0 0
      %698 = vmatmul.mubr.bf16.gmra.mrb[0].mxu0 %v452
      %v699 = vpop.f32.mrb[0].mxu0
      %v700 = vadd.f32 0.0, %v699
      %v701 = vpop.f32.mrb[0].mxu0
      %v702 = vpop.f32.mrb[0].mxu0
      %v703 = vadd.f32 0.0, %v702
      %v704 = vpop.f32.mrb[0].mxu0
      %705 = vmatprep.mubr.bf16.mxu0 0
      %706 = vmatmul.mubr.bf16.gmra.mrb[0].mxu0 %v453
      %v707 = vpop.f32.mrb[0].mxu0
      %v708 = vadd.f32 0.0, %v707
      %v709 = vpop.f32.mrb[0].mxu0
      %v710 = vpop.f32.mrb[0].mxu0
      %v711 = vadd.f32 0.0, %v710
      %v712 = vpop.f32.mrb[0].mxu0
      %713 = vdwg.mxu0
      %vm714 = vcmp.lt.s32.totalorder %v268, 0
      %v715 = vsub.s32 0, %v268
      %v716 = vsel %vm714, %v715, %v268
      %v717 = vshrl.u32 %v716, 4
      %v718 = vand.u32 %v716, 15
      %v719 = vsub.s32 0, %v718
      %v720 = vsel %vm714, %v719, %v718
      %vm721 = vcmp.lt.s32.totalorder %v269, 0
      %v722 = vsub.s32 0, %v269
      %v723 = vsel %vm721, %v722, %v269
      %v724 = vshrl.u32 %v723, 4
      %v725 = vand.u32 %v723, 15
      %v726 = vsub.s32 0, %v725
      %v727 = vsel %vm721, %v726, %v725
      %vm728 = vcmp.lt.s32.totalorder %v270, 0
      %v729 = vsub.s32 0, %v270
      %v730 = vsel %vm728, %v729, %v270
      %v731 = vshrl.u32 %v730, 4
      %v732 = vand.u32 %v730, 15
      %v733 = vsub.s32 0, %v732
      %v734 = vsel %vm728, %v733, %v732
      %vm735 = vcmp.lt.s32.totalorder %v271, 0
      %v736 = vsub.s32 0, %v271
      %v737 = vsel %vm735, %v736, %v271
      %v738 = vshrl.u32 %v737, 4
      %v739 = vand.u32 %v737, 15
      %v740 = vsub.s32 0, %v739
      %v741 = vsel %vm735, %v740, %v739
      %vm742 = vcmp.lt.s32.totalorder %v272, 0
      %v743 = vsub.s32 0, %v272
      %v744 = vsel %vm742, %v743, %v272
      %v745 = vshrl.u32 %v744, 4
      %v746 = vand.u32 %v744, 15
      %v747 = vsub.s32 0, %v746
      %v748 = vsel %vm742, %v747, %v746
      %vm749 = vcmp.lt.s32.totalorder %v273, 0
      %v750 = vsub.s32 0, %v273
      %v751 = vsel %vm749, %v750, %v273
      %v752 = vshrl.u32 %v751, 4
      %v753 = vand.u32 %v751, 15
      %v754 = vsub.s32 0, %v753
      %v755 = vsel %vm749, %v754, %v753
      %vm756 = vcmp.ne.s32.totalorder %v720, 0
      %vm757 = vcmp.ne.s32.totalorder %v727, 0
      %vm758 = vcmp.ne.s32.totalorder %v734, 0
      %vm759 = vcmp.ne.s32.totalorder %v741, 0
      %vm760 = vcmp.ne.s32.totalorder %v748, 0
      %vm761 = vcmp.ne.s32.totalorder %v755, 0
      %vm762 = vcmp.lt.s32.totalorder %v720, 0
      %vm763 = vcmp.lt.s32.totalorder %v727, 0
      %vm764 = vcmp.lt.s32.totalorder %v734, 0
      %vm765 = vcmp.lt.s32.totalorder %v741, 0
      %vm766 = vcmp.lt.s32.totalorder %v748, 0
      %vm767 = vcmp.lt.s32.totalorder %v755, 0
      %vm768 = vmand %vm762, %vm756
      %vm769 = vmand %vm763, %vm757
      %vm770 = vmand %vm764, %vm758
      %vm771 = vmand %vm765, %vm759
      %vm772 = vmand %vm766, %vm760
      %vm773 = vmand %vm767, %vm761
      %v774 = vadd.s32 %v720, 16
      %v775 = vadd.s32 %v727, 16
      %v776 = vadd.s32 %v734, 16
      %v777 = vadd.s32 %v741, 16
      %v778 = vadd.s32 %v748, 16
      %v779 = vadd.s32 %v755, 16
      %v780 = vsel %vm768, %v774, %v720
      %v781 = vsel %vm769, %v775, %v727
      %v782 = vsel %vm770, %v776, %v734
      %v783 = vsel %vm771, %v777, %v741
      %v784 = vsel %vm772, %v778, %v748
      %v785 = vsel %vm773, %v779, %v755
      %vm786 = vcmp.eq.s32.totalorder %v780, 0
      %vm787 = vcmp.eq.s32.totalorder %v781, 0
      %vm788 = vcmp.eq.s32.totalorder %v782, 0
      %vm789 = vcmp.eq.s32.totalorder %v783, 0
      %vm790 = vcmp.eq.s32.totalorder %v784, 0
      %vm791 = vcmp.eq.s32.totalorder %v785, 0
      %v792 = vrot.slane %v553, 7
      %v793 = vrot.slane %v556, 7
      %v794 = vrot.slane %v561, 7
      %v795 = vrot.slane %v564, 7
      %v796 = vrot.slane %v569, 7
      %v797 = vrot.slane %v572, 7
      %vm798 = vcmp.lt.s32.totalorder %v268, 1
      %v799 = vsel %vm798, %v796, %v797
      %v800 = vsel %vm798, %v795, %v796
      %v801 = vsel %vm798, %v794, %v795
      %v802 = vsel %vm798, %v793, %v794
      %v803 = vsel %vm798, %v792, %v793
      %v804 = vsel %vm798, %v797, %v792
      %v805 = vsel %vm786, 0.0, %v804
      %v806 = vsel %vm787, 0.0, %v803
      %v807 = vsel %vm788, 0.0, %v802
      %v808 = vsel %vm789, 0.0, %v801
      %v809 = vsel %vm790, 0.0, %v800
      %v810 = vsel %vm791, 0.0, %v799
      %v827 = vunpack.c.l.b16 %v576
      %v828 = vunpack.c.l.b16 %v577
      %v829 = vunpack.c.l.b16 %v578
      %v830 = vunpack.c.l.b16 %v579
      %v831 = vunpack.c.l.b16 %v580
      %v832 = vunpack.c.l.b16 %v581
      %v833 = vunpack.c.l.b16 %v582
      %v834 = vunpack.c.l.b16 %v583
      %v835 = vunpack.c.l.b16 %v584
      %v836 = vunpack.c.l.b16 %v585
      %v837 = vunpack.c.l.b16 %v586
      %v838 = vunpack.c.l.b16 %v587
      %v839 = vunpack.c.l.b16 %v588
      %v840 = vunpack.c.l.b16 %v589
      %v841 = vunpack.c.l.b16 %v590
      %v842 = vunpack.c.l.b16 %v591
      %v843 = vpack.c.b16 %v828, %v827
      %v844 = vpack.c.b16 %v830, %v829
      %v845 = vpack.c.b16 %v832, %v831
      %v846 = vpack.c.b16 %v834, %v833
      %v847 = vpack.c.b16 %v836, %v835
      %v848 = vpack.c.b16 %v838, %v837
      %v849 = vpack.c.b16 %v840, %v839
      %v850 = vpack.c.b16 %v842, %v841
      %859 = vmatprep.subr.bf16.mxu0 0
      %860 = vmatpush1.bf16.msra.mxu0 %v843
      %861 = vmatprep.subr.bf16.mxu0 0
      %862 = vmatpush1.bf16.msra.mxu0 %v844
      %863 = vmatprep.subr.bf16.mxu0 0
      %864 = vmatpush1.bf16.msra.mxu0 %v845
      %865 = vmatprep.subr.bf16.mxu0 0
      %866 = vmatpush1.bf16.msra.mxu0 %v846
      %867 = vmatprep.subr.bf16.mxu0 0
      %868 = vmatpush1.bf16.msra.mxu0 %v847
      %869 = vmatprep.subr.bf16.mxu0 0
      %870 = vmatpush1.bf16.msra.mxu0 %v848
      %871 = vmatprep.subr.bf16.mxu0 0
      %872 = vmatpush1.bf16.msra.mxu0 %v849
      %873 = vmatprep.subr.bf16.mxu0 0
      %874 = vmatpush1.bf16.msra.mxu0 %v850
      %875 = vmatprep.subr.bf16.mxu0 0
      %876 = vmatpush1.bf16.msra.mxu0 0
      %877 = vmatprep.subr.bf16.mxu0 0
      %878 = vmatpush1.bf16.msra.mxu0 0
      %879 = vmatprep.subr.bf16.mxu0 0
      %880 = vmatpush1.bf16.msra.mxu0 0
      %881 = vmatprep.subr.bf16.mxu0 0
      %882 = vmatpush1.bf16.msra.mxu0 0
      %883 = vmatprep.subr.bf16.mxu0 0
      %884 = vmatpush1.bf16.msra.mxu0 0
      %885 = vmatprep.subr.bf16.mxu0 0
      %886 = vmatpush1.bf16.msra.mxu0 0
      %887 = vmatprep.subr.bf16.mxu0 0
      %888 = vmatpush1.bf16.msra.mxu0 0
      %889 = vmatprep.subr.bf16.mxu0 0
      %890 = vmatpush1.bf16.msra.mxu0 0
      %891 = vmatprep.mubr.bf16.mxu0 0
      %892 = vmatmul.mubr.bf16.gmra.mrb[0].mxu0 %v451
      %v893 = vpop.f32.mrb[0].mxu0
      %v894 = vadd.f32 %v805, %v893
      %v895 = vpop.f32.mrb[0].mxu0
      %v896 = vpop.f32.mrb[0].mxu0
      %v897 = vadd.f32 %v806, %v896
      %v898 = vpop.f32.mrb[0].mxu0
      %899 = vmatprep.mubr.bf16.mxu0 0
      %900 = vmatmul.mubr.bf16.gmra.mrb[0].mxu0 %v452
      %v901 = vpop.f32.mrb[0].mxu0
      %v902 = vadd.f32 %v807, %v901
      %v903 = vpop.f32.mrb[0].mxu0
      %v904 = vpop.f32.mrb[0].mxu0
      %v905 = vadd.f32 %v808, %v904
      %v906 = vpop.f32.mrb[0].mxu0
      %907 = vmatprep.mubr.bf16.mxu0 0
      %908 = vmatmul.mubr.bf16.gmra.mrb[0].mxu0 %v453
      %v909 = vpop.f32.mrb[0].mxu0
      %v910 = vadd.f32 %v809, %v909
      %v911 = vpop.f32.mrb[0].mxu0
      %v912 = vpop.f32.mrb[0].mxu0
      %v913 = vadd.f32 %v810, %v912
      %v914 = vpop.f32.mrb[0].mxu0
      %915 = vdwg.mxu0
      %vm916 = vcmp.eq.s32.totalorder %v780, 15
      %vm917 = vcmp.eq.s32.totalorder %v781, 15
      %vm918 = vcmp.eq.s32.totalorder %v782, 15
      %vm919 = vcmp.eq.s32.totalorder %v783, 15
      %vm920 = vcmp.eq.s32.totalorder %v784, 15
      %vm921 = vcmp.eq.s32.totalorder %v785, 15
      %v922 = vrot.slane %v692, 1
      %v923 = vrot.slane %v695, 1
      %v924 = vrot.slane %v700, 1
      %v925 = vrot.slane %v703, 1
      %v926 = vrot.slane %v708, 1
      %v927 = vrot.slane %v711, 1
      %vm928 = vcmp.lt.s32.totalorder %v268, 7
      %v929 = vsel %vm928, %v926, %v927
      %v930 = vsel %vm928, %v925, %v926
      %v931 = vsel %vm928, %v924, %v925
      %v932 = vsel %vm928, %v923, %v924
      %v933 = vsel %vm928, %v922, %v923
      %v934 = vsel %vm928, %v927, %v922
      %v935 = vsel %vm916, 0.0, %v933
      %v936 = vsel %vm917, 0.0, %v932
      %v937 = vsel %vm918, 0.0, %v931
      %v938 = vsel %vm919, 0.0, %v930
      %v939 = vsel %vm920, 0.0, %v929
      %v940 = vsel %vm921, 0.0, %v934
      %v941 = vadd.f32 %v894, %v935
      %v942 = vadd.f32 %v897, %v936
      %v943 = vadd.f32 %v902, %v937
      %v944 = vadd.f32 %v905, %v938
      %v945 = vadd.f32 %v910, %v939
      %v946 = vadd.f32 %v913, %v940
      %v947 = vpack.c.bf16 %v942, %v941
      %v948 = vpack.c.bf16 %v944, %v943
      %v949 = vpack.c.bf16 %v946, %v945
      %v953 = vunpack.c.l.b16 %v947
      %v954 = vunpack.c.h.b16 %v947
      %v955 = vunpack.c.l.b16 %v948
      %v956 = vunpack.c.h.b16 %v948
      %v957 = vunpack.c.l.b16 %v949
      %v958 = vunpack.c.h.b16 %v949
      %v959 = vpack.c.b16 %v953, %v953
      %v960 = vpack.c.b16 %v954, %v954
      %v961 = vpack.c.b16 %v955, %v955
      %v962 = vpack.c.b16 %v956, %v956
      %v963 = vpack.c.b16 %v957, %v957
      %v964 = vpack.c.b16 %v958, %v958
      %971 = vst [vmem:[%s238] sm:$0xf] %v959
      %972 = vst [vmem:[%s238 + $0x4] sm:$0xf] %v960
      %973 = vst [vmem:[%s238 + $0x8] sm:$0xf] %v961
      %974 = vst [vmem:[%s238 + $0xc] sm:$0xf] %v962
      %975 = vst [vmem:[%s238 + $0x10] sm:$0xf] %v963
      %976 = vst [vmem:[%s238 + $0x14] sm:$0xf] %v964
      %v977 = vadd.f32 %v941, %v942
      %v978 = vadd.f32 %v977, %v943
      %v979 = vadd.f32 %v978, %v944
      %v980 = vadd.f32 %v979, %v945
      %v981 = vadd.f32 %v980, %v946
      %v982 = vrot.slane %v981, 4
      %v983 = vadd.f32 %v981, %v982
      %v984 = vrot.slane %v983, 2
      %v985 = vadd.f32 %v983, %v984
      %v986 = vrot.slane %v985, 1
      %v987 = vadd.f32 %v985, %v986
      %v988 = vmul.f32 %v941, %v941
      %v989 = vmul.f32 %v942, %v942
      %v990 = vmul.f32 %v943, %v943
      %v991 = vmul.f32 %v944, %v944
      %v992 = vmul.f32 %v945, %v945
      %v993 = vmul.f32 %v946, %v946
      %v994 = vadd.f32 %v988, %v989
      %v995 = vadd.f32 %v994, %v990
      %v996 = vadd.f32 %v995, %v991
      %v997 = vadd.f32 %v996, %v992
      %v998 = vadd.f32 %v997, %v993
      %v999 = vrot.slane %v998, 4
      %v1000 = vadd.f32 %v998, %v999
      %v1001 = vrot.slane %v1000, 2
      %v1002 = vadd.f32 %v1000, %v1001
      %v1003 = vrot.slane %v1002, 1
      %v1004 = vadd.f32 %v1002, %v1003
      %vm1005 = vcmask 1040384
      %v1006 = vsel %vm1005, %v987, %v1004
      %1007 = vst [vmem:[%s243] sm:$0x3] %v1006
      %s1008 = smul.u32 3, %s17
      %p1009 = scmp.lt.s32.totalorder %s1008, 5
      %s1010 = scalar_select %p1009, %s1008, 5
      %s1011 = smul.addr %s1010, 2
      %s1012 = smul.addr %s1011, 4
      %s1013 = scalar_lea.vmem %s4, %s1012
      %p1014 = scmp.lt.s32.totalorder %s17, 1
      %s1015 = scalar_select %p1014, %s17, 1
      %s1016 = smul.addr %s1015, 2
      %s1017 = scalar_lea.vmem %s5, %s1016
      // Predicated region
      $region37: #{basic_block_forward.3} parent=35 // pred_check
        %p1018 = pneg %p124
      $region38: #{basic_block_forward.3} parent=35 // pred_check_branch
        %1020 = sbr.rel (%p1018) target = $region40
      $region39: #{basic_block_forward.3} parent=35 // pred_region
        %s1021 = smul.u32 3, %s17
      $region40: #{basic_block_forward.3} parent=35 // pred_fallthru
        _
      // Predicated region
      $region41: #{basic_block_forward.3} parent=35 // pred_check
        %p1022 = pneg %p150
      $region42: #{basic_block_forward.3} parent=35 // pred_check_branch
        %1024 = sbr.rel (%p1022) target = $region44
      $region43: #{basic_block_forward.3} parent=35 // pred_region
        _
      $region44: #{basic_block_forward.3} parent=35 // pred_fallthru
        _
    $region36: #{basic_block_forward.3} parent=5 // pred_fallthru
      _
    %p1025 = scmp.le.s32.totalorder 2, %s12
    // Predicated region
    $region45: #{basic_block_forward.3} parent=5 // pred_check
      %p1026 = pneg %p1025
    $region46: #{basic_block_forward.3} parent=5 // pred_check_branch
      %1028 = sbr.rel (%p1026) target = $region48
    $region47: #{basic_block_forward.3} parent=5 // pred_region
      %s1029 = ssub.s32 %s12, 2
      // Predicated region
      $region49: #{basic_block_forward.3} parent=47 // pred_check
        %p1030 = pneg %p130
      $region50: #{basic_block_forward.3} parent=47 // pred_check_branch
        %1032 = sbr.rel (%p1030) target = $region52
      $region51: #{basic_block_forward.3} parent=47 // pred_region
        %s1033 = smul.u32 3, %s18
        %p1034 = scmp.lt.s32.totalorder %s1033, 5
        %s1035 = scalar_select %p1034, %s1033, 5
        %s1036 = smul.addr %s1035, 2
        %s1037 = smul.addr %s1036, 4
        %s1038 = scalar_lea.vmem %s4, %s1037
      $region52: #{basic_block_forward.3} parent=47 // pred_fallthru
        _
      // Predicated region
      $region53: #{basic_block_forward.3} parent=47 // pred_check
        %p1039 = pneg %p156
      $region54: #{basic_block_forward.3} parent=47 // pred_check_branch
        %1041 = sbr.rel (%p1039) target = $region56
      $region55: #{basic_block_forward.3} parent=47 // pred_region
        %p1042 = scmp.lt.s32.totalorder %s18, 1
        %s1043 = scalar_select %p1042, %s18, 1
        %s1044 = smul.addr %s1043, 2
        %s1045 = scalar_lea.vmem %s5, %s1044
      $region56: #{basic_block_forward.3} parent=47 // pred_fallthru
        _
    $region48: #{basic_block_forward.3} parent=5 // pred_fallthru
      _
  $region6: #{basic_block_forward.3} parent=0 // loop_footer
    %s16 = sadd.s32 1, %s12
  $region7: #{basic_block_forward.3} parent=0 // loop_footer_branch
    %11 = sbr.rel target = $region3
  $region8: #{basic_block_forward.3} parent=0 // loop_exit
    _

// kernel: basic_block_forward.4
$region0: #{basic_block_forward.4}
  #allocation0 [shape = 'u32[]', space=smem, size = 0x4, offset = 0x4, fixed_abs, tag = 'smem constant byte address 0x4 - core index']
  #allocation1 [shape = 'u32[144,128]{1,0:T(1,128)}', space=vmem, size = 0x12000, scoped, tag = 'internal scratch']
  %s0 = inlined_call_operand.vmem [shape: bf16[6,16,128], index: 0, kind: input, shape index: {}]
  %s1 = inlined_call_operand.vmem [shape: bf16[3,128,128], index: 1, kind: input, shape index: {}]
  %s2 = inlined_call_operand.vmem [shape: f32[1,128], index: 2, kind: input, shape index: {}]
  %s3 = inlined_call_operand.vmem [shape: f32[1,128], index: 3, kind: input, shape index: {}]
  %s4 = inlined_call_operand.vmem [shape: bf16[6,16,128], index: 4, kind: output, shape index: {0}]
  %s5 = inlined_call_operand.vmem [shape: f32[2,2,128], index: 5, kind: output, shape index: {1}]
  %6 = xla_tuple %s4, %s5
  %s7 = sld [smem:[#allocation0]]
  $region57: #{basic_block_forward.4} parent=0
    _
  %s9 = ssub.s32 1, %s7
  %s10 = scalar_select 0, %s9, %s7
  loop: start=0, step=1, limit=4
  $region2: #{basic_block_forward.4} parent=0 // loop_pre_header
    _
  $region3: #{basic_block_forward.4} parent=0 // loop_header
    %s12 = sphi 0, %s16
    %p13 = scmp.ge.s32.totalorder %s12, 4
    %s22 = sphi 0, %s24
    %s25 = sphi 0, %s22
    %s26 = sphi 0, %s25
    %s42 = sphi 0, %s26
    %s46 = sphi 0, %s46
    %s48 = sphi 0, %s46
    %s49 = sphi 0, %s48
    %s63 = sphi 0, %s49
    %s67 = sphi 0, %s67
    %s69 = sphi 0, %s67
    %s70 = sphi 0, %s69
    %s84 = sphi 0, %s70
    %s88 = sphi 0, %s88
    %s90 = sphi 0, %s88
    %s91 = sphi 0, %s90
    %s105 = sphi 0, %s91
    %s111 = sphi 0, %s113
    %s114 = sphi 0, %s111
    %s115 = sphi 0, %s114
    %s131 = sphi 0, %s115
    %s137 = sphi 0, %s139
    %s140 = sphi 0, %s137
    %s141 = sphi 0, %s140
    %s157 = sphi 0, %s141
  $region4: #{basic_block_forward.4} parent=0 // loop_header_branch
    %15 = sbr.rel (%p13) target = $region8
  $region5: #{basic_block_forward.4} parent=0 // loop_body
    %s17 = ssub.s32 %s12, 1
    %s18 = ssub.s32 %s12, 2
    %s19 = sadd.s32 %s12, 1
    %s20 = ssub.s32 %s12, %s19
    %p21 = scmp.eq.s32.totalorder %s20, 0
    %s23 = sadd.s32 %s22, 1
    %s24 = scalar_select %p21, %s22, %s23
    %p27 = pneg %p21
    %p28 = scmp.eq.s32.totalorder %s12, 1
    %p29 = por %p27, %p28
    %p30 = scmp.ne.s32.totalorder %s22, %s25
    %p31 = scmp.eq.s32.totalorder %s12, 0
    %p32 = por %p30, %p31
    %p33 = scmp.ne.s32.totalorder %s22, %s25
    %p34 = scmp.eq.s32.totalorder %s17, 1
    %p35 = por %p33, %p34
    %p36 = scmp.ne.s32.totalorder %s25, %s26
    %p37 = scmp.eq.s32.totalorder %s17, 0
    %p38 = por %p36, %p37
    %p39 = scmp.ne.s32.totalorder %s25, %s26
    %p40 = scmp.eq.s32.totalorder %s18, 1
    %p41 = por %p39, %p40
    %p43 = scmp.ne.s32.totalorder %s26, %s42
    %p44 = scmp.eq.s32.totalorder %s18, 0
    %p45 = por %p43, %p44
    %s47 = sadd.s32 %s46, 1
    %p50 = scmp.eq.s32.totalorder %s12, 1
    %p51 = scmp.ne.s32.totalorder %s46, %s48
    %p52 = scmp.eq.s32.totalorder %s12, 0
    %p53 = por %p51, %p52
    %p54 = scmp.ne.s32.totalorder %s46, %s48
    %p55 = scmp.eq.s32.totalorder %s17, 1
    %p56 = por %p54, %p55
    %p57 = scmp.ne.s32.totalorder %s48, %s49
    %p58 = scmp.eq.s32.totalorder %s17, 0
    %p59 = por %p57, %p58
    %p60 = scmp.ne.s32.totalorder %s48, %s49
    %p61 = scmp.eq.s32.totalorder %s18, 1
    %p62 = por %p60, %p61
    %p64 = scmp.ne.s32.totalorder %s49, %s63
    %p65 = scmp.eq.s32.totalorder %s18, 0
    %p66 = por %p64, %p65
    %s68 = sadd.s32 %s67, 1
    %p71 = scmp.eq.s32.totalorder %s12, 1
    %p72 = scmp.ne.s32.totalorder %s67, %s69
    %p73 = scmp.eq.s32.totalorder %s12, 0
    %p74 = por %p72, %p73
    %p75 = scmp.ne.s32.totalorder %s67, %s69
    %p76 = scmp.eq.s32.totalorder %s17, 1
    %p77 = por %p75, %p76
    %p78 = scmp.ne.s32.totalorder %s69, %s70
    %p79 = scmp.eq.s32.totalorder %s17, 0
    %p80 = por %p78, %p79
    %p81 = scmp.ne.s32.totalorder %s69, %s70
    %p82 = scmp.eq.s32.totalorder %s18, 1
    %p83 = por %p81, %p82
    %p85 = scmp.ne.s32.totalorder %s70, %s84
    %p86 = scmp.eq.s32.totalorder %s18, 0
    %p87 = por %p85, %p86
    %s89 = sadd.s32 %s88, 1
    %p92 = scmp.eq.s32.totalorder %s12, 1
    %p93 = scmp.ne.s32.totalorder %s88, %s90
    %p94 = scmp.eq.s32.totalorder %s12, 0
    %p95 = por %p93, %p94
    %p96 = scmp.ne.s32.totalorder %s88, %s90
    %p97 = scmp.eq.s32.totalorder %s17, 1
    %p98 = por %p96, %p97
    %p99 = scmp.ne.s32.totalorder %s90, %s91
    %p100 = scmp.eq.s32.totalorder %s17, 0
    %p101 = por %p99, %p100
    %p102 = scmp.ne.s32.totalorder %s90, %s91
    %p103 = scmp.eq.s32.totalorder %s18, 1
    %p104 = por %p102, %p103
    %p106 = scmp.ne.s32.totalorder %s91, %s105
    %p107 = scmp.eq.s32.totalorder %s18, 0
    %p108 = por %p106, %p107
    %s109 = ssub.s32 %s12, %s19
    %p110 = scmp.eq.s32.totalorder %s109, 0
    %s112 = sadd.s32 %s111, 1
    %s113 = scalar_select %p110, %s111, %s112
    %p116 = pneg %p110
    %p117 = scmp.eq.s32.totalorder %s12, 1
    %p118 = por %p116, %p117
    %p119 = scmp.ne.s32.totalorder %s111, %s114
    %p120 = scmp.eq.s32.totalorder %s12, 0
    %p121 = por %p119, %p120
    %p122 = scmp.ne.s32.totalorder %s111, %s114
    %p123 = scmp.eq.s32.totalorder %s17, 1
    %p124 = por %p122, %p123
    %p125 = scmp.ne.s32.totalorder %s114, %s115
    %p126 = scmp.eq.s32.totalorder %s17, 0
    %p127 = por %p125, %p126
    %p128 = scmp.ne.s32.totalorder %s114, %s115
    %p129 = scmp.eq.s32.totalorder %s18, 1
    %p130 = por %p128, %p129
    %p132 = scmp.ne.s32.totalorder %s115, %s131
    %p133 = scmp.eq.s32.totalorder %s18, 0
    %p134 = por %p132, %p133
    %s135 = ssub.s32 %s12, %s19
    %p136 = scmp.eq.s32.totalorder %s135, 0
    %s138 = sadd.s32 %s137, 1
    %s139 = scalar_select %p136, %s137, %s138
    %p142 = pneg %p136
    %p143 = scmp.eq.s32.totalorder %s12, 1
    %p144 = por %p142, %p143
    %p145 = scmp.ne.s32.totalorder %s137, %s140
    %p146 = scmp.eq.s32.totalorder %s12, 0
    %p147 = por %p145, %p146
    %p148 = scmp.ne.s32.totalorder %s137, %s140
    %p149 = scmp.eq.s32.totalorder %s17, 1
    %p150 = por %p148, %p149
    %p151 = scmp.ne.s32.totalorder %s140, %s141
    %p152 = scmp.eq.s32.totalorder %s17, 0
    %p153 = por %p151, %p152
    %p154 = scmp.ne.s32.totalorder %s140, %s141
    %p155 = scmp.eq.s32.totalorder %s18, 1
    %p156 = por %p154, %p155
    %p158 = scmp.ne.s32.totalorder %s141, %s157
    %p159 = scmp.eq.s32.totalorder %s18, 0
    %p160 = por %p158, %p159
    %p161 = scmp.le.s32.totalorder 1, %s12
    %p162 = scmp.lt.s32.totalorder %s12, 3
    %p163 = pnand %p161, %p162
    %p164 = pneg %p163
    // Predicated region
    $region9: #{basic_block_forward.4} parent=5 // pred_check
      _
    $region10: #{basic_block_forward.4} parent=5 // pred_check_branch
      %166 = sbr.rel (%p163) target = $region12
    $region11: #{basic_block_forward.4} parent=5 // pred_region
      %s167 = ssub.s32 %s12, 1
      // Predicated region
      $region13: #{basic_block_forward.4} parent=11 // pred_check
        %p168 = pneg %p59
      $region14: #{basic_block_forward.4} parent=11 // pred_check_branch
        %170 = sbr.rel (%p168) target = $region16
      $region15: #{basic_block_forward.4} parent=11 // pred_region
        _
      $region16: #{basic_block_forward.4} parent=11 // pred_fallthru
        _
      // Predicated region
      $region17: #{basic_block_forward.4} parent=11 // pred_check
        %p171 = pneg %p80
      $region18: #{basic_block_forward.4} parent=11 // pred_check_branch
        %173 = sbr.rel (%p171) target = $region20
      $region19: #{basic_block_forward.4} parent=11 // pred_region
        _
      $region20: #{basic_block_forward.4} parent=11 // pred_fallthru
        _
      // Predicated region
      $region21: #{basic_block_forward.4} parent=11 // pred_check
        %p174 = pneg %p101
      $region22: #{basic_block_forward.4} parent=11 // pred_check_branch
        %176 = sbr.rel (%p174) target = $region24
      $region23: #{basic_block_forward.4} parent=11 // pred_region
        _
      $region24: #{basic_block_forward.4} parent=11 // pred_fallthru
        _
    $region12: #{basic_block_forward.4} parent=5 // pred_fallthru
      _
    %p177 = scmp.lt.s32.totalorder %s12, 2
    // Predicated region
    $region25: #{basic_block_forward.4} parent=5 // pred_check
      %p178 = pneg %p177
    $region26: #{basic_block_forward.4} parent=5 // pred_check_branch
      %180 = sbr.rel (%p178) target = $region28
    $region27: #{basic_block_forward.4} parent=5 // pred_region
      // Predicated region
      $region29: #{basic_block_forward.4} parent=27 // pred_check
        %p181 = pneg %p32
      $region30: #{basic_block_forward.4} parent=27 // pred_check_branch
        %183 = sbr.rel (%p181) target = $region32
      $region31: #{basic_block_forward.4} parent=27 // pred_region
        %s184 = smul.u32 3, %s12
        %p185 = scmp.lt.s32.totalorder %s184, 5
        %s186 = scalar_select %p185, %s184, 5
        %s187 = smul.addr %s186, 2
        %s188 = smul.addr %s187, 4
        %s189 = scalar_lea.vmem %s0, %s188
        %s190 = smul.u32 3, %s12
      $region32: #{basic_block_forward.4} parent=27 // pred_fallthru
        _
    $region28: #{basic_block_forward.4} parent=5 // pred_fallthru
      _
    %p191 = scmp.le.s32.totalorder 1, %s12
    %p192 = scmp.lt.s32.totalorder %s12, 3
    %p193 = pnand %p191, %p192
    %p194 = pneg %p193
    // Predicated region
    $region33: #{basic_block_forward.4} parent=5 // pred_check
      _
    $region34: #{basic_block_forward.4} parent=5 // pred_check_branch
      %196 = sbr.rel (%p193) target = $region36
    $region35: #{basic_block_forward.4} parent=5 // pred_region
      %s197 = ssub.s32 %s12, 1
      %s198 = smul.u32 3, %s17
      %p199 = scmp.lt.s32.totalorder %s198, 5
      %s200 = scalar_select %p199, %s198, 5
      %s201 = smul.addr %s200, 2
      %s202 = smul.addr %s201, 4
      %s203 = scalar_lea.vmem %s0, %s202
      %p204 = pneg %p38
      %p205 = pneg %p35
      %p206 = pneg %p59
      %p207 = pneg %p56
      %p208 = pneg %p80
      %p209 = pneg %p77
      %p210 = pneg %p101
      %p211 = pneg %p98
      %p212 = pneg %p127
      %p213 = pneg %p124
      %s214 = smul.u32 3, %s17
      %p215 = scmp.lt.s32.totalorder %s214, 5
      %s216 = scalar_select %p215, %s214, 5
      %s217 = smul.addr %s216, 2
      %s218 = smul.addr %s217, 4
      %s219 = scalar_lea.vmem %s4, %s218
      %p220 = pneg %p153
      %p221 = pneg %p150
      %p222 = scmp.lt.s32.totalorder %s17, 1
      %s223 = scalar_select %p222, %s17, 1
      %s224 = smul.addr %s223, 2
      %s225 = scalar_lea.vmem %s5, %s224
      %s226 = smul.u32 3, %s17
      %p227 = scmp.lt.s32.totalorder %s226, 5
      %s228 = scalar_select %p227, %s226, 5
      %s229 = smul.addr %s228, 2
      %s230 = smul.addr %s229, 4
      %s231 = scalar_lea.vmem %s0, %s230
      %s232 = smul.u32 3, %s17
      %s233 = smul.u32 3, %s17
      %p234 = scmp.lt.s32.totalorder %s233, 5
      %s235 = scalar_select %p234, %s233, 5
      %s236 = smul.addr %s235, 2
      %s237 = smul.addr %s236, 4
      %s238 = scalar_lea.vmem %s4, %s237
      %s239 = smul.u32 3, %s17
      %p240 = scmp.lt.s32.totalorder %s17, 1
      %s241 = scalar_select %p240, %s17, 1
      %s242 = smul.addr %s241, 2
      %s243 = scalar_lea.vmem %s5, %s242
      %v245 = vld [vmem:[%s231] sm:$0xf]
      %v246 = vld [vmem:[%s231 + $0x4] sm:$0xf]
      %v247 = vld [vmem:[%s231 + $0x8] sm:$0xf]
      %v248 = vld [vmem:[%s231 + $0xc] sm:$0xf]
      %v249 = vld [vmem:[%s231 + $0x10] sm:$0xf]
      %v250 = vld [vmem:[%s231 + $0x14] sm:$0xf]
      %v251 = vunpack.c.l.bf16 %v245
      %v252 = vunpack.c.l.bf16 %v246
      %v253 = vunpack.c.l.bf16 %v247
      %v254 = vunpack.c.l.bf16 %v248
      %v255 = vunpack.c.l.bf16 %v249
      %v256 = vunpack.c.l.bf16 %v250
      %v257 = vld [vmem:[%s2] sm:$0x1]
      %v259 = vlaneseq
      %v260 = vshrl.u32 %v259, 7
      %v261 = vsub.s32 0, %v260
      %v262 = vrot.slane %v257, %v261
      %v264 = vmul.f32 %v251, %v262
      %v265 = vmul.f32 %v252, %v262
      %v266 = vmul.f32 %v253, %v262
      %v267 = vmul.f32 %v254, %v262
      %v268 = vmul.f32 %v255, %v262
      %v269 = vmul.f32 %v256, %v262
      %v270 = vld [vmem:[%s3] sm:$0x1]
      %v272 = vlaneseq
      %v273 = vshrl.u32 %v272, 7
      %v274 = vsub.s32 0, %v273
      %v275 = vrot.slane %v270, %v274
      %v277 = vadd.f32 %v264, %v275
      %v278 = vadd.f32 %v265, %v275
      %v279 = vadd.f32 %v266, %v275
      %v280 = vadd.f32 %v267, %v275
      %v281 = vadd.f32 %v268, %v275
      %v282 = vadd.f32 %v269, %v275
      %v283 = vmax.f32 %v277, 0.0
      %v284 = vmax.f32 %v278, 0.0
      %v285 = vmax.f32 %v279, 0.0
      %v286 = vmax.f32 %v280, 0.0
      %v287 = vmax.f32 %v281, 0.0
      %v288 = vmax.f32 %v282, 0.0
      %v289 = vpack.c.bf16 %v284, %v283
      %v290 = vpack.c.bf16 %v286, %v285
      %v291 = vpack.c.bf16 %v288, %v287
      %v292 = vld [vmem:[%s1] sm:$0xf]
      %v293 = vld [vmem:[%s1 + $0x4] sm:$0xf]
      %v294 = vld [vmem:[%s1 + $0x8] sm:$0xf]
      %v295 = vld [vmem:[%s1 + $0xc] sm:$0xf]
      %v296 = vld [vmem:[%s1 + $0x10] sm:$0xf]
      %v297 = vld [vmem:[%s1 + $0x14] sm:$0xf]
      %v298 = vld [vmem:[%s1 + $0x18] sm:$0xf]
      %v299 = vld [vmem:[%s1 + $0x1c] sm:$0xf]
      %v300 = vld [vmem:[%s1 + $0x20] sm:$0xf]
      %v301 = vld [vmem:[%s1 + $0x24] sm:$0xf]
      %v302 = vld [vmem:[%s1 + $0x28] sm:$0xf]
      %v303 = vld [vmem:[%s1 + $0x2c] sm:$0xf]
      %v304 = vld [vmem:[%s1 + $0x30] sm:$0xf]
      %v305 = vld [vmem:[%s1 + $0x34] sm:$0xf]
      %v306 = vld [vmem:[%s1 + $0x38] sm:$0xf]
      %v307 = vld [vmem:[%s1 + $0x3c] sm:$0xf]
      %v324 = vunpack.c.l.b16 %v292
      %v325 = vunpack.c.l.b16 %v293
      %v326 = vunpack.c.l.b16 %v294
      %v327 = vunpack.c.l.b16 %v295
      %v328 = vunpack.c.l.b16 %v296
      %v329 = vunpack.c.l.b16 %v297
      %v330 = vunpack.c.l.b16 %v298
      %v331 = vunpack.c.l.b16 %v299
      %v332 = vunpack.c.l.b16 %v300
      %v333 = vunpack.c.l.b16 %v301
      %v334 = vunpack.c.l.b16 %v302
      %v335 = vunpack.c.l.b16 %v303
      %v336 = vunpack.c.l.b16 %v304
      %v337 = vunpack.c.l.b16 %v305
      %v338 = vunpack.c.l.b16 %v306
      %v339 = vunpack.c.l.b16 %v307
      %v340 = vpack.c.b16 %v325, %v324
      %v341 = vpack.c.b16 %v327, %v326
      %v342 = vpack.c.b16 %v329, %v328
      %v343 = vpack.c.b16 %v331, %v330
      %v344 = vpack.c.b16 %v333, %v332
      %v345 = vpack.c.b16 %v335, %v334
      %v346 = vpack.c.b16 %v337, %v336
      %v347 = vpack.c.b16 %v339, %v338
      %356 = vmatprep.subr.bf16.mxu0 0
      %357 = vmatpush1.bf16.msra.mxu0 %v340
      %358 = vmatprep.subr.bf16.mxu0 0
      %359 = vmatpush1.bf16.msra.mxu0 %v341
      %360 = vmatprep.subr.bf16.mxu0 0
      %361 = vmatpush1.bf16.msra.mxu0 %v342
      %362 = vmatprep.subr.bf16.mxu0 0
      %363 = vmatpush1.bf16.msra.mxu0 %v343
      %364 = vmatprep.subr.bf16.mxu0 0
      %365 = vmatpush1.bf16.msra.mxu0 %v344
      %366 = vmatprep.subr.bf16.mxu0 0
      %367 = vmatpush1.bf16.msra.mxu0 %v345
      %368 = vmatprep.subr.bf16.mxu0 0
      %369 = vmatpush1.bf16.msra.mxu0 %v346
      %370 = vmatprep.subr.bf16.mxu0 0
      %371 = vmatpush1.bf16.msra.mxu0 %v347
      %372 = vmatprep.subr.bf16.mxu0 0
      %373 = vmatpush1.bf16.msra.mxu0 0
      %374 = vmatprep.subr.bf16.mxu0 0
      %375 = vmatpush1.bf16.msra.mxu0 0
      %376 = vmatprep.subr.bf16.mxu0 0
      %377 = vmatpush1.bf16.msra.mxu0 0
      %378 = vmatprep.subr.bf16.mxu0 0
      %379 = vmatpush1.bf16.msra.mxu0 0
      %380 = vmatprep.subr.bf16.mxu0 0
      %381 = vmatpush1.bf16.msra.mxu0 0
      %382 = vmatprep.subr.bf16.mxu0 0
      %383 = vmatpush1.bf16.msra.mxu0 0
      %384 = vmatprep.subr.bf16.mxu0 0
      %385 = vmatpush1.bf16.msra.mxu0 0
      %386 = vmatprep.subr.bf16.mxu0 0
      %387 = vmatpush1.bf16.msra.mxu0 0
      %388 = vmatprep.mubr.bf16.mxu0 0
      %389 = vmatmul.mubr.bf16.gmra.mrb[0].mxu0 %v289
      %v390 = vpop.f32.mrb[0].mxu0
      %v391 = vadd.f32 0.0, %v390
      %v392 = vpop.f32.mrb[0].mxu0
      %v393 = vpop.f32.mrb[0].mxu0
      %v394 = vadd.f32 0.0, %v393
      %v395 = vpop.f32.mrb[0].mxu0
      %396 = vmatprep.mubr.bf16.mxu0 0
      %397 = vmatmul.mubr.bf16.gmra.mrb[0].mxu0 %v290
      %v398 = vpop.f32.mrb[0].mxu0
      %v399 = vadd.f32 0.0, %v398
      %v400 = vpop.f32.mrb[0].mxu0
      %v401 = vpop.f32.mrb[0].mxu0
      %v402 = vadd.f32 0.0, %v401
      %v403 = vpop.f32.mrb[0].mxu0
      %404 = vmatprep.mubr.bf16.mxu0 0
      %405 = vmatmul.mubr.bf16.gmra.mrb[0].mxu0 %v291
      %v406 = vpop.f32.mrb[0].mxu0
      %v407 = vadd.f32 0.0, %v406
      %v408 = vpop.f32.mrb[0].mxu0
      %v409 = vpop.f32.mrb[0].mxu0
      %v410 = vadd.f32 0.0, %v409
      %v411 = vpop.f32.mrb[0].mxu0
      %412 = vdwg.mxu0
      %s413 = scalar_lea.vmem %s1, 64
      %v414 = vld [vmem:[%s413] sm:$0xf]
      %v415 = vld [vmem:[%s413 + $0x4] sm:$0xf]
      %v416 = vld [vmem:[%s413 + $0x8] sm:$0xf]
      %v417 = vld [vmem:[%s413 + $0xc] sm:$0xf]
      %v418 = vld [vmem:[%s413 + $0x10] sm:$0xf]
      %v419 = vld [vmem:[%s413 + $0x14] sm:$0xf]
      %v420 = vld [vmem:[%s413 + $0x18] sm:$0xf]
      %v421 = vld [vmem:[%s413 + $0x1c] sm:$0xf]
      %v422 = vld [vmem:[%s413 + $0x20] sm:$0xf]
      %v423 = vld [vmem:[%s413 + $0x24] sm:$0xf]
      %v424 = vld [vmem:[%s413 + $0x28] sm:$0xf]
      %v425 = vld [vmem:[%s413 + $0x2c] sm:$0xf]
      %v426 = vld [vmem:[%s413 + $0x30] sm:$0xf]
      %v427 = vld [vmem:[%s413 + $0x34] sm:$0xf]
      %v428 = vld [vmem:[%s413 + $0x38] sm:$0xf]
      %v429 = vld [vmem:[%s413 + $0x3c] sm:$0xf]
      %s430 = scalar_lea.vmem %s1, 128
      %v431 = vld [vmem:[%s430] sm:$0xf]
      %v432 = vld [vmem:[%s430 + $0x4] sm:$0xf]
      %v433 = vld [vmem:[%s430 + $0x8] sm:$0xf]
      %v434 = vld [vmem:[%s430 + $0xc] sm:$0xf]
      %v435 = vld [vmem:[%s430 + $0x10] sm:$0xf]
      %v436 = vld [vmem:[%s430 + $0x14] sm:$0xf]
      %v437 = vld [vmem:[%s430 + $0x18] sm:$0xf]
      %v438 = vld [vmem:[%s430 + $0x1c] sm:$0xf]
      %v439 = vld [vmem:[%s430 + $0x20] sm:$0xf]
      %v440 = vld [vmem:[%s430 + $0x24] sm:$0xf]
      %v441 = vld [vmem:[%s430 + $0x28] sm:$0xf]
      %v442 = vld [vmem:[%s430 + $0x2c] sm:$0xf]
      %v443 = vld [vmem:[%s430 + $0x30] sm:$0xf]
      %v444 = vld [vmem:[%s430 + $0x34] sm:$0xf]
      %v445 = vld [vmem:[%s430 + $0x38] sm:$0xf]
      %v446 = vld [vmem:[%s430 + $0x3c] sm:$0xf]
      %v463 = vunpack.c.l.b16 %v431
      %v464 = vunpack.c.l.b16 %v432
      %v465 = vunpack.c.l.b16 %v433
      %v466 = vunpack.c.l.b16 %v434
      %v467 = vunpack.c.l.b16 %v435
      %v468 = vunpack.c.l.b16 %v436
      %v469 = vunpack.c.l.b16 %v437
      %v470 = vunpack.c.l.b16 %v438
      %v471 = vunpack.c.l.b16 %v439
      %v472 = vunpack.c.l.b16 %v440
      %v473 = vunpack.c.l.b16 %v441
      %v474 = vunpack.c.l.b16 %v442
      %v475 = vunpack.c.l.b16 %v443
      %v476 = vunpack.c.l.b16 %v444
      %v477 = vunpack.c.l.b16 %v445
      %v478 = vunpack.c.l.b16 %v446
      %v479 = vpack.c.b16 %v464, %v463
      %v480 = vpack.c.b16 %v466, %v465
      %v481 = vpack.c.b16 %v468, %v467
      %v482 = vpack.c.b16 %v470, %v469
      %v483 = vpack.c.b16 %v472, %v471
      %v484 = vpack.c.b16 %v474, %v473
      %v485 = vpack.c.b16 %v476, %v475
      %v486 = vpack.c.b16 %v478, %v477
      %495 = vmatprep.subr.bf16.mxu0 0
      %496 = vmatpush1.bf16.msra.mxu0 %v479
      %497 = vmatprep.subr.bf16.mxu0 0
      %498 = vmatpush1.bf16.msra.mxu0 %v480
      %499 = vmatprep.subr.bf16.mxu0 0
      %500 = vmatpush1.bf16.msra.mxu0 %v481
      %501 = vmatprep.subr.bf16.mxu0 0
      %502 = vmatpush1.bf16.msra.mxu0 %v482
      %503 = vmatprep.subr.bf16.mxu0 0
      %504 = vmatpush1.bf16.msra.mxu0 %v483
      %505 = vmatprep.subr.bf16.mxu0 0
      %506 = vmatpush1.bf16.msra.mxu0 %v484
      %507 = vmatprep.subr.bf16.mxu0 0
      %508 = vmatpush1.bf16.msra.mxu0 %v485
      %509 = vmatprep.subr.bf16.mxu0 0
      %510 = vmatpush1.bf16.msra.mxu0 %v486
      %511 = vmatprep.subr.bf16.mxu0 0
      %512 = vmatpush1.bf16.msra.mxu0 0
      %513 = vmatprep.subr.bf16.mxu0 0
      %514 = vmatpush1.bf16.msra.mxu0 0
      %515 = vmatprep.subr.bf16.mxu0 0
      %516 = vmatpush1.bf16.msra.mxu0 0
      %517 = vmatprep.subr.bf16.mxu0 0
      %518 = vmatpush1.bf16.msra.mxu0 0
      %519 = vmatprep.subr.bf16.mxu0 0
      %520 = vmatpush1.bf16.msra.mxu0 0
      %521 = vmatprep.subr.bf16.mxu0 0
      %522 = vmatpush1.bf16.msra.mxu0 0
      %523 = vmatprep.subr.bf16.mxu0 0
      %524 = vmatpush1.bf16.msra.mxu0 0
      %525 = vmatprep.subr.bf16.mxu0 0
      %526 = vmatpush1.bf16.msra.mxu0 0
      %527 = vmatprep.mubr.bf16.mxu0 0
      %528 = vmatmul.mubr.bf16.gmra.mrb[0].mxu0 %v289
      %v529 = vpop.f32.mrb[0].mxu0
      %v530 = vadd.f32 0.0, %v529
      %v531 = vpop.f32.mrb[0].mxu0
      %v532 = vpop.f32.mrb[0].mxu0
      %v533 = vadd.f32 0.0, %v532
      %v534 = vpop.f32.mrb[0].mxu0
      %535 = vmatprep.mubr.bf16.mxu0 0
      %536 = vmatmul.mubr.bf16.gmra.mrb[0].mxu0 %v290
      %v537 = vpop.f32.mrb[0].mxu0
      %v538 = vadd.f32 0.0, %v537
      %v539 = vpop.f32.mrb[0].mxu0
      %v540 = vpop.f32.mrb[0].mxu0
      %v541 = vadd.f32 0.0, %v540
      %v542 = vpop.f32.mrb[0].mxu0
      %543 = vmatprep.mubr.bf16.mxu0 0
      %544 = vmatmul.mubr.bf16.gmra.mrb[0].mxu0 %v291
      %v545 = vpop.f32.mrb[0].mxu0
      %v546 = vadd.f32 0.0, %v545
      %v547 = vpop.f32.mrb[0].mxu0
      %v548 = vpop.f32.mrb[0].mxu0
      %v549 = vadd.f32 0.0, %v548
      %v550 = vpop.f32.mrb[0].mxu0
      %551 = vdwg.mxu0
      %v552 = vlaneseq
      %v553 = vshrl.u32 %v552, 7
      %v554 = vadd.s32 %v553, 8
      %v555 = vadd.s32 %v553, 16
      %v556 = vadd.s32 %v553, 24
      %v557 = vadd.s32 %v553, 32
      %v558 = vadd.s32 %v553, 40
      %vm559 = vcmp.lt.s32.totalorder %v553, 0
      %v560 = vsub.s32 0, %v553
      %v561 = vsel %vm559, %v560, %v553
      %v562 = vshrl.u32 %v561, 4
      %v563 = vand.u32 %v561, 15
      %v564 = vsub.s32 0, %v563
      %v565 = vsel %vm559, %v564, %v563
      %vm566 = vcmp.lt.s32.totalorder %v554, 0
      %v567 = vsub.s32 0, %v554
      %v568 = vsel %vm566, %v567, %v554
      %v569 = vshrl.u32 %v568, 4
      %v570 = vand.u32 %v568, 15
      %v571 = vsub.s32 0, %v570
      %v572 = vsel %vm566, %v571, %v570
      %vm573 = vcmp.lt.s32.totalorder %v555, 0
      %v574 = vsub.s32 0, %v555
      %v575 = vsel %vm573, %v574, %v555
      %v576 = vshrl.u32 %v575, 4
      %v577 = vand.u32 %v575, 15
      %v578 = vsub.s32 0, %v577
      %v579 = vsel %vm573, %v578, %v577
      %vm580 = vcmp.lt.s32.totalorder %v556, 0
      %v581 = vsub.s32 0, %v556
      %v582 = vsel %vm580, %v581, %v556
      %v583 = vshrl.u32 %v582, 4
      %v584 = vand.u32 %v582, 15
      %v585 = vsub.s32 0, %v584
      %v586 = vsel %vm580, %v585, %v584
      %vm587 = vcmp.lt.s32.totalorder %v557, 0
      %v588 = vsub.s32 0, %v557
      %v589 = vsel %vm587, %v588, %v557
      %v590 = vshrl.u32 %v589, 4
      %v591 = vand.u32 %v589, 15
      %v592 = vsub.s32 0, %v591
      %v593 = vsel %vm587, %v592, %v591
      %vm594 = vcmp.lt.s32.totalorder %v558, 0
      %v595 = vsub.s32 0, %v558
      %v596 = vsel %vm594, %v595, %v558
      %v597 = vshrl.u32 %v596, 4
      %v598 = vand.u32 %v596, 15
      %v599 = vsub.s32 0, %v598
      %v600 = vsel %vm594, %v599, %v598
      %vm601 = vcmp.ne.s32.totalorder %v565, 0
      %vm602 = vcmp.ne.s32.totalorder %v572, 0
      %vm603 = vcmp.ne.s32.totalorder %v579, 0
      %vm604 = vcmp.ne.s32.totalorder %v586, 0
      %vm605 = vcmp.ne.s32.totalorder %v593, 0
      %vm606 = vcmp.ne.s32.totalorder %v600, 0
      %vm607 = vcmp.lt.s32.totalorder %v565, 0
      %vm608 = vcmp.lt.s32.totalorder %v572, 0
      %vm609 = vcmp.lt.s32.totalorder %v579, 0
      %vm610 = vcmp.lt.s32.totalorder %v586, 0
      %vm611 = vcmp.lt.s32.totalorder %v593, 0
      %vm612 = vcmp.lt.s32.totalorder %v600, 0
      %vm613 = vmand %vm607, %vm601
      %vm614 = vmand %vm608, %vm602
      %vm615 = vmand %vm609, %vm603
      %vm616 = vmand %vm610, %vm604
      %vm617 = vmand %vm611, %vm605
      %vm618 = vmand %vm612, %vm606
      %v619 = vadd.s32 %v565, 16
      %v620 = vadd.s32 %v572, 16
      %v621 = vadd.s32 %v579, 16
      %v622 = vadd.s32 %v586, 16
      %v623 = vadd.s32 %v593, 16
      %v624 = vadd.s32 %v600, 16
      %v625 = vsel %vm613, %v619, %v565
      %v626 = vsel %vm614, %v620, %v572
      %v627 = vsel %vm615, %v621, %v579
      %v628 = vsel %vm616, %v622, %v586
      %v629 = vsel %vm617, %v623, %v593
      %v630 = vsel %vm618, %v624, %v600
      %vm631 = vcmp.eq.s32.totalorder %v625, 0
      %vm632 = vcmp.eq.s32.totalorder %v626, 0
      %vm633 = vcmp.eq.s32.totalorder %v627, 0
      %vm634 = vcmp.eq.s32.totalorder %v628, 0
      %vm635 = vcmp.eq.s32.totalorder %v629, 0
      %vm636 = vcmp.eq.s32.totalorder %v630, 0
      %v637 = vrot.slane %v391, 7
      %v638 = vrot.slane %v394, 7
      %v639 = vrot.slane %v399, 7
      %v640 = vrot.slane %v402, 7
      %v641 = vrot.slane %v407, 7
      %v642 = vrot.slane %v410, 7
      %vm643 = vcmp.lt.s32.totalorder %v553, 1
      %v644 = vsel %vm643, %v641, %v642
      %v645 = vsel %vm643, %v640, %v641
      %v646 = vsel %vm643, %v639, %v640
      %v647 = vsel %vm643, %v638, %v639
      %v648 = vsel %vm643, %v637, %v638
      %v649 = vsel %vm643, %v642, %v637
      %v650 = vsel %vm631, 0.0, %v649
      %v651 = vsel %vm632, 0.0, %v648
      %v652 = vsel %vm633, 0.0, %v647
      %v653 = vsel %vm634, 0.0, %v646
      %v654 = vsel %vm635, 0.0, %v645
      %v655 = vsel %vm636, 0.0, %v644
      %v672 = vunpack.c.l.b16 %v414
      %v673 = vunpack.c.l.b16 %v415
      %v674 = vunpack.c.l.b16 %v416
      %v675 = vunpack.c.l.b16 %v417
      %v676 = vunpack.c.l.b16 %v418
      %v677 = vunpack.c.l.b16 %v419
      %v678 = vunpack.c.l.b16 %v420
      %v679 = vunpack.c.l.b16 %v421
      %v680 = vunpack.c.l.b16 %v422
      %v681 = vunpack.c.l.b16 %v423
      %v682 = vunpack.c.l.b16 %v424
      %v683 = vunpack.c.l.b16 %v425
      %v684 = vunpack.c.l.b16 %v426
      %v685 = vunpack.c.l.b16 %v427
      %v686 = vunpack.c.l.b16 %v428
      %v687 = vunpack.c.l.b16 %v429
      %v688 = vpack.c.b16 %v673, %v672
      %v689 = vpack.c.b16 %v675, %v674
      %v690 = vpack.c.b16 %v677, %v676
      %v691 = vpack.c.b16 %v679, %v678
      %v692 = vpack.c.b16 %v681, %v680
      %v693 = vpack.c.b16 %v683, %v682
      %v694 = vpack.c.b16 %v685, %v684
      %v695 = vpack.c.b16 %v687, %v686
      %704 = vmatprep.subr.bf16.mxu0 0
      %705 = vmatpush1.bf16.msra.mxu0 %v688
      %706 = vmatprep.subr.bf16.mxu0 0
      %707 = vmatpush1.bf16.msra.mxu0 %v689
      %708 = vmatprep.subr.bf16.mxu0 0
      %709 = vmatpush1.bf16.msra.mxu0 %v690
      %710 = vmatprep.subr.bf16.mxu0 0
      %711 = vmatpush1.bf16.msra.mxu0 %v691
      %712 = vmatprep.subr.bf16.mxu0 0
      %713 = vmatpush1.bf16.msra.mxu0 %v692
      %714 = vmatprep.subr.bf16.mxu0 0
      %715 = vmatpush1.bf16.msra.mxu0 %v693
      %716 = vmatprep.subr.bf16.mxu0 0
      %717 = vmatpush1.bf16.msra.mxu0 %v694
      %718 = vmatprep.subr.bf16.mxu0 0
      %719 = vmatpush1.bf16.msra.mxu0 %v695
      %720 = vmatprep.subr.bf16.mxu0 0
      %721 = vmatpush1.bf16.msra.mxu0 0
      %722 = vmatprep.subr.bf16.mxu0 0
      %723 = vmatpush1.bf16.msra.mxu0 0
      %724 = vmatprep.subr.bf16.mxu0 0
      %725 = vmatpush1.bf16.msra.mxu0 0
      %726 = vmatprep.subr.bf16.mxu0 0
      %727 = vmatpush1.bf16.msra.mxu0 0
      %728 = vmatprep.subr.bf16.mxu0 0
      %729 = vmatpush1.bf16.msra.mxu0 0
      %730 = vmatprep.subr.bf16.mxu0 0
      %731 = vmatpush1.bf16.msra.mxu0 0
      %732 = vmatprep.subr.bf16.mxu0 0
      %733 = vmatpush1.bf16.msra.mxu0 0
      %734 = vmatprep.subr.bf16.mxu0 0
      %735 = vmatpush1.bf16.msra.mxu0 0
      %736 = vmatprep.mubr.bf16.mxu0 0
      %737 = vmatmul.mubr.bf16.gmra.mrb[0].mxu0 %v289
      %v738 = vpop.f32.mrb[0].mxu0
      %v739 = vadd.f32 %v650, %v738
      %v740 = vpop.f32.mrb[0].mxu0
      %v741 = vpop.f32.mrb[0].mxu0
      %v742 = vadd.f32 %v651, %v741
      %v743 = vpop.f32.mrb[0].mxu0
      %744 = vmatprep.mubr.bf16.mxu0 0
      %745 = vmatmul.mubr.bf16.gmra.mrb[0].mxu0 %v290
      %v746 = vpop.f32.mrb[0].mxu0
      %v747 = vadd.f32 %v652, %v746
      %v748 = vpop.f32.mrb[0].mxu0
      %v749 = vpop.f32.mrb[0].mxu0
      %v750 = vadd.f32 %v653, %v749
      %v751 = vpop.f32.mrb[0].mxu0
      %752 = vmatprep.mubr.bf16.mxu0 0
      %753 = vmatmul.mubr.bf16.gmra.mrb[0].mxu0 %v291
      %v754 = vpop.f32.mrb[0].mxu0
      %v755 = vadd.f32 %v654, %v754
      %v756 = vpop.f32.mrb[0].mxu0
      %v757 = vpop.f32.mrb[0].mxu0
      %v758 = vadd.f32 %v655, %v757
      %v759 = vpop.f32.mrb[0].mxu0
      %760 = vdwg.mxu0
      %vm761 = vcmp.eq.s32.totalorder %v625, 15
      %vm762 = vcmp.eq.s32.totalorder %v626, 15
      %vm763 = vcmp.eq.s32.totalorder %v627, 15
      %vm764 = vcmp.eq.s32.totalorder %v628, 15
      %vm765 = vcmp.eq.s32.totalorder %v629, 15
      %vm766 = vcmp.eq.s32.totalorder %v630, 15
      %v767 = vrot.slane %v530, 1
      %v768 = vrot.slane %v533, 1
      %v769 = vrot.slane %v538, 1
      %v770 = vrot.slane %v541, 1
      %v771 = vrot.slane %v546, 1
      %v772 = vrot.slane %v549, 1
      %vm773 = vcmp.lt.s32.totalorder %v553, 7
      %v774 = vsel %vm773, %v771, %v772
      %v775 = vsel %vm773, %v770, %v771
      %v776 = vsel %vm773, %v769, %v770
      %v777 = vsel %vm773, %v768, %v769
      %v778 = vsel %vm773, %v767, %v768
      %v779 = vsel %vm773, %v772, %v767
      %v780 = vsel %vm761, 0.0, %v778
      %v781 = vsel %vm762, 0.0, %v777
      %v782 = vsel %vm763, 0.0, %v776
      %v783 = vsel %vm764, 0.0, %v775
      %v784 = vsel %vm765, 0.0, %v774
      %v785 = vsel %vm766, 0.0, %v779
      %v786 = vadd.f32 %v739, %v780
      %v787 = vadd.f32 %v742, %v781
      %v788 = vadd.f32 %v747, %v782
      %v789 = vadd.f32 %v750, %v783
      %v790 = vadd.f32 %v755, %v784
      %v791 = vadd.f32 %v758, %v785
      %v792 = vpack.c.bf16 %v787, %v786
      %v793 = vpack.c.bf16 %v789, %v788
      %v794 = vpack.c.bf16 %v791, %v790
      %v798 = vunpack.c.l.b16 %v792
      %v799 = vunpack.c.h.b16 %v792
      %v800 = vunpack.c.l.b16 %v793
      %v801 = vunpack.c.h.b16 %v793
      %v802 = vunpack.c.l.b16 %v794
      %v803 = vunpack.c.h.b16 %v794
      %v804 = vpack.c.b16 %v798, %v798
      %v805 = vpack.c.b16 %v799, %v799
      %v806 = vpack.c.b16 %v800, %v800
      %v807 = vpack.c.b16 %v801, %v801
      %v808 = vpack.c.b16 %v802, %v802
      %v809 = vpack.c.b16 %v803, %v803
      %816 = vst [vmem:[%s238] sm:$0xf] %v804
      %817 = vst [vmem:[%s238 + $0x4] sm:$0xf] %v805
      %818 = vst [vmem:[%s238 + $0x8] sm:$0xf] %v806
      %819 = vst [vmem:[%s238 + $0xc] sm:$0xf] %v807
      %820 = vst [vmem:[%s238 + $0x10] sm:$0xf] %v808
      %821 = vst [vmem:[%s238 + $0x14] sm:$0xf] %v809
      %v822 = vadd.f32 %v786, %v787
      %v823 = vadd.f32 %v822, %v788
      %v824 = vadd.f32 %v823, %v789
      %v825 = vadd.f32 %v824, %v790
      %v826 = vadd.f32 %v825, %v791
      %v827 = vrot.slane %v826, 4
      %v828 = vadd.f32 %v826, %v827
      %v829 = vrot.slane %v828, 2
      %v830 = vadd.f32 %v828, %v829
      %v831 = vrot.slane %v830, 1
      %v832 = vadd.f32 %v830, %v831
      %v833 = vmul.f32 %v786, %v786
      %v834 = vmul.f32 %v787, %v787
      %v835 = vmul.f32 %v788, %v788
      %v836 = vmul.f32 %v789, %v789
      %v837 = vmul.f32 %v790, %v790
      %v838 = vmul.f32 %v791, %v791
      %v839 = vadd.f32 %v833, %v834
      %v840 = vadd.f32 %v839, %v835
      %v841 = vadd.f32 %v840, %v836
      %v842 = vadd.f32 %v841, %v837
      %v843 = vadd.f32 %v842, %v838
      %v844 = vrot.slane %v843, 4
      %v845 = vadd.f32 %v843, %v844
      %v846 = vrot.slane %v845, 2
      %v847 = vadd.f32 %v845, %v846
      %v848 = vrot.slane %v847, 1
      %v849 = vadd.f32 %v847, %v848
      %vm850 = vcmask 1040384
      %v851 = vsel %vm850, %v832, %v849
      %852 = vst [vmem:[%s243] sm:$0x3] %v851
      %s853 = smul.u32 3, %s17
      %p854 = scmp.lt.s32.totalorder %s853, 5
      %s855 = scalar_select %p854, %s853, 5
      %s856 = smul.addr %s855, 2
      %s857 = smul.addr %s856, 4
      %s858 = scalar_lea.vmem %s4, %s857
      %p859 = scmp.lt.s32.totalorder %s17, 1
      %s860 = scalar_select %p859, %s17, 1
      %s861 = smul.addr %s860, 2
      %s862 = scalar_lea.vmem %s5, %s861
      // Predicated region
      $region37: #{basic_block_forward.4} parent=35 // pred_check
        %p863 = pneg %p124
      $region38: #{basic_block_forward.4} parent=35 // pred_check_branch
        %865 = sbr.rel (%p863) target = $region40
      $region39: #{basic_block_forward.4} parent=35 // pred_region
        %s866 = smul.u32 3, %s17
      $region40: #{basic_block_forward.4} parent=35 // pred_fallthru
        _
      // Predicated region
      $region41: #{basic_block_forward.4} parent=35 // pred_check
        %p867 = pneg %p150
      $region42: #{basic_block_forward.4} parent=35 // pred_check_branch
        %869 = sbr.rel (%p867) target = $region44
      $region43: #{basic_block_forward.4} parent=35 // pred_region
        _
      $region44: #{basic_block_forward.4} parent=35 // pred_fallthru
        _
    $region36: #{basic_block_forward.4} parent=5 // pred_fallthru
      _
    %p870 = scmp.le.s32.totalorder 2, %s12
    // Predicated region
    $region45: #{basic_block_forward.4} parent=5 // pred_check
      %p871 = pneg %p870
    $region46: #{basic_block_forward.4} parent=5 // pred_check_branch
      %873 = sbr.rel (%p871) target = $region48
    $region47: #{basic_block_forward.4} parent=5 // pred_region
      %s874 = ssub.s32 %s12, 2
      // Predicated region
      $region49: #{basic_block_forward.4} parent=47 // pred_check
        %p875 = pneg %p130
      $region50: #{basic_block_forward.4} parent=47 // pred_check_branch
        %877 = sbr.rel (%p875) target = $region52
      $region51: #{basic_block_forward.4} parent=47 // pred_region
        %s878 = smul.u32 3, %s18
        %p879 = scmp.lt.s32.totalorder %s878, 5
        %s880 = scalar_select %p879, %s878, 5
        %s881 = smul.addr %s880, 2
        %s882 = smul.addr %s881, 4
        %s883 = scalar_lea.vmem %s4, %s882
      $region52: #{basic_block_forward.4} parent=47 // pred_fallthru
        _
      // Predicated region
      $region53: #{basic_block_forward.4} parent=47 // pred_check
        %p884 = pneg %p156
      $region54: #{basic_block_forward.4} parent=47 // pred_check_branch
        %886 = sbr.rel (%p884) target = $region56
      $region55: #{basic_block_forward.4} parent=47 // pred_region
        %p887 = scmp.lt.s32.totalorder %s18, 1
        %s888 = scalar_select %p887, %s18, 1
        %s889 = smul.addr %s888, 2
        %s890 = scalar_lea.vmem %s5, %s889
      $region56: #{basic_block_forward.4} parent=47 // pred_fallthru
        _
    $region48: #{basic_block_forward.4} parent=5 // pred_fallthru
      _
  $region6: #{basic_block_forward.4} parent=0 // loop_footer
    %s16 = sadd.s32 1, %s12
  $region7: #{basic_block_forward.4} parent=0 // loop_footer_branch
    %11 = sbr.rel target = $region3
  $region8: #{basic_block_forward.4} parent=0 // loop_exit
    _

// kernel: basic_block_forward.5
$region0: #{basic_block_forward.5}
  #allocation0 [shape = 'u32[]', space=smem, size = 0x4, offset = 0x4, fixed_abs, tag = 'smem constant byte address 0x4 - core index']
  #allocation1 [shape = 'u32[144,128]{1,0:T(1,128)}', space=vmem, size = 0x12000, scoped, tag = 'internal scratch']
  %s0 = inlined_call_operand.vmem [shape: bf16[6,16,128], index: 0, kind: input, shape index: {}]
  %s1 = inlined_call_operand.vmem [shape: f32[1,128], index: 1, kind: input, shape index: {}]
  %s2 = inlined_call_operand.vmem [shape: f32[1,128], index: 2, kind: input, shape index: {}]
  %s3 = inlined_call_operand.vmem [shape: bf16[6,16,128], index: 3, kind: input, shape index: {}]
  %s4 = inlined_call_operand.vmem [shape: f32[6,16,128], index: 4, kind: output, shape index: {}]
  %s5 = sld [smem:[#allocation0]]
  $region49: #{basic_block_forward.5} parent=0
    _
  %s7 = ssub.s32 1, %s5
  %s8 = scalar_select 0, %s7, %s5
  loop: start=0, step=1, limit=4
  $region2: #{basic_block_forward.5} parent=0 // loop_pre_header
    _
  $region3: #{basic_block_forward.5} parent=0 // loop_header
    %s10 = sphi 0, %s14
    %p11 = scmp.ge.s32.totalorder %s10, 4
    %s20 = sphi 0, %s22
    %s23 = sphi 0, %s20
    %s24 = sphi 0, %s23
    %s40 = sphi 0, %s24
    %s44 = sphi 0, %s44
    %s46 = sphi 0, %s44
    %s47 = sphi 0, %s46
    %s61 = sphi 0, %s47
    %s65 = sphi 0, %s65
    %s67 = sphi 0, %s65
    %s68 = sphi 0, %s67
    %s82 = sphi 0, %s68
    %s88 = sphi 0, %s90
    %s91 = sphi 0, %s88
    %s92 = sphi 0, %s91
    %s108 = sphi 0, %s92
    %s114 = sphi 0, %s116
    %s117 = sphi 0, %s114
    %s118 = sphi 0, %s117
    %s134 = sphi 0, %s118
  $region4: #{basic_block_forward.5} parent=0 // loop_header_branch
    %13 = sbr.rel (%p11) target = $region8
  $region5: #{basic_block_forward.5} parent=0 // loop_body
    %s15 = ssub.s32 %s10, 1
    %s16 = ssub.s32 %s10, 2
    %s17 = sadd.s32 %s10, 1
    %s18 = ssub.s32 %s10, %s17
    %p19 = scmp.eq.s32.totalorder %s18, 0
    %s21 = sadd.s32 %s20, 1
    %s22 = scalar_select %p19, %s20, %s21
    %p25 = pneg %p19
    %p26 = scmp.eq.s32.totalorder %s10, 1
    %p27 = por %p25, %p26
    %p28 = scmp.ne.s32.totalorder %s20, %s23
    %p29 = scmp.eq.s32.totalorder %s10, 0
    %p30 = por %p28, %p29
    %p31 = scmp.ne.s32.totalorder %s20, %s23
    %p32 = scmp.eq.s32.totalorder %s15, 1
    %p33 = por %p31, %p32
    %p34 = scmp.ne.s32.totalorder %s23, %s24
    %p35 = scmp.eq.s32.totalorder %s15, 0
    %p36 = por %p34, %p35
    %p37 = scmp.ne.s32.totalorder %s23, %s24
    %p38 = scmp.eq.s32.totalorder %s16, 1
    %p39 = por %p37, %p38
    %p41 = scmp.ne.s32.totalorder %s24, %s40
    %p42 = scmp.eq.s32.totalorder %s16, 0
    %p43 = por %p41, %p42
    %s45 = sadd.s32 %s44, 1
    %p48 = scmp.eq.s32.totalorder %s10, 1
    %p49 = scmp.ne.s32.totalorder %s44, %s46
    %p50 = scmp.eq.s32.totalorder %s10, 0
    %p51 = por %p49, %p50
    %p52 = scmp.ne.s32.totalorder %s44, %s46
    %p53 = scmp.eq.s32.totalorder %s15, 1
    %p54 = por %p52, %p53
    %p55 = scmp.ne.s32.totalorder %s46, %s47
    %p56 = scmp.eq.s32.totalorder %s15, 0
    %p57 = por %p55, %p56
    %p58 = scmp.ne.s32.totalorder %s46, %s47
    %p59 = scmp.eq.s32.totalorder %s16, 1
    %p60 = por %p58, %p59
    %p62 = scmp.ne.s32.totalorder %s47, %s61
    %p63 = scmp.eq.s32.totalorder %s16, 0
    %p64 = por %p62, %p63
    %s66 = sadd.s32 %s65, 1
    %p69 = scmp.eq.s32.totalorder %s10, 1
    %p70 = scmp.ne.s32.totalorder %s65, %s67
    %p71 = scmp.eq.s32.totalorder %s10, 0
    %p72 = por %p70, %p71
    %p73 = scmp.ne.s32.totalorder %s65, %s67
    %p74 = scmp.eq.s32.totalorder %s15, 1
    %p75 = por %p73, %p74
    %p76 = scmp.ne.s32.totalorder %s67, %s68
    %p77 = scmp.eq.s32.totalorder %s15, 0
    %p78 = por %p76, %p77
    %p79 = scmp.ne.s32.totalorder %s67, %s68
    %p80 = scmp.eq.s32.totalorder %s16, 1
    %p81 = por %p79, %p80
    %p83 = scmp.ne.s32.totalorder %s68, %s82
    %p84 = scmp.eq.s32.totalorder %s16, 0
    %p85 = por %p83, %p84
    %s86 = ssub.s32 %s10, %s17
    %p87 = scmp.eq.s32.totalorder %s86, 0
    %s89 = sadd.s32 %s88, 1
    %s90 = scalar_select %p87, %s88, %s89
    %p93 = pneg %p87
    %p94 = scmp.eq.s32.totalorder %s10, 1
    %p95 = por %p93, %p94
    %p96 = scmp.ne.s32.totalorder %s88, %s91
    %p97 = scmp.eq.s32.totalorder %s10, 0
    %p98 = por %p96, %p97
    %p99 = scmp.ne.s32.totalorder %s88, %s91
    %p100 = scmp.eq.s32.totalorder %s15, 1
    %p101 = por %p99, %p100
    %p102 = scmp.ne.s32.totalorder %s91, %s92
    %p103 = scmp.eq.s32.totalorder %s15, 0
    %p104 = por %p102, %p103
    %p105 = scmp.ne.s32.totalorder %s91, %s92
    %p106 = scmp.eq.s32.totalorder %s16, 1
    %p107 = por %p105, %p106
    %p109 = scmp.ne.s32.totalorder %s92, %s108
    %p110 = scmp.eq.s32.totalorder %s16, 0
    %p111 = por %p109, %p110
    %s112 = ssub.s32 %s10, %s17
    %p113 = scmp.eq.s32.totalorder %s112, 0
    %s115 = sadd.s32 %s114, 1
    %s116 = scalar_select %p113, %s114, %s115
    %p119 = pneg %p113
    %p120 = scmp.eq.s32.totalorder %s10, 1
    %p121 = por %p119, %p120
    %p122 = scmp.ne.s32.totalorder %s114, %s117
    %p123 = scmp.eq.s32.totalorder %s10, 0
    %p124 = por %p122, %p123
    %p125 = scmp.ne.s32.totalorder %s114, %s117
    %p126 = scmp.eq.s32.totalorder %s15, 1
    %p127 = por %p125, %p126
    %p128 = scmp.ne.s32.totalorder %s117, %s118
    %p129 = scmp.eq.s32.totalorder %s15, 0
    %p130 = por %p128, %p129
    %p131 = scmp.ne.s32.totalorder %s117, %s118
    %p132 = scmp.eq.s32.totalorder %s16, 1
    %p133 = por %p131, %p132
    %p135 = scmp.ne.s32.totalorder %s118, %s134
    %p136 = scmp.eq.s32.totalorder %s16, 0
    %p137 = por %p135, %p136
    %p138 = scmp.le.s32.totalorder 1, %s10
    %p139 = scmp.lt.s32.totalorder %s10, 3
    %p140 = pnand %p138, %p139
    %p141 = pneg %p140
    // Predicated region
    $region9: #{basic_block_forward.5} parent=5 // pred_check
      _
    $region10: #{basic_block_forward.5} parent=5 // pred_check_branch
      %143 = sbr.rel (%p140) target = $region12
    $region11: #{basic_block_forward.5} parent=5 // pred_region
      %s144 = ssub.s32 %s10, 1
      // Predicated region
      $region13: #{basic_block_forward.5} parent=11 // pred_check
        %p145 = pneg %p57
      $region14: #{basic_block_forward.5} parent=11 // pred_check_branch
        %147 = sbr.rel (%p145) target = $region16
      $region15: #{basic_block_forward.5} parent=11 // pred_region
        _
      $region16: #{basic_block_forward.5} parent=11 // pred_fallthru
        _
      // Predicated region
      $region17: #{basic_block_forward.5} parent=11 // pred_check
        %p148 = pneg %p78
      $region18: #{basic_block_forward.5} parent=11 // pred_check_branch
        %150 = sbr.rel (%p148) target = $region20
      $region19: #{basic_block_forward.5} parent=11 // pred_region
        _
      $region20: #{basic_block_forward.5} parent=11 // pred_fallthru
        _
    $region12: #{basic_block_forward.5} parent=5 // pred_fallthru
      _
    %p151 = scmp.lt.s32.totalorder %s10, 2
    // Predicated region
    $region21: #{basic_block_forward.5} parent=5 // pred_check
      %p152 = pneg %p151
    $region22: #{basic_block_forward.5} parent=5 // pred_check_branch
      %154 = sbr.rel (%p152) target = $region24
    $region23: #{basic_block_forward.5} parent=5 // pred_region
      // Predicated region
      $region25: #{basic_block_forward.5} parent=23 // pred_check
        %p155 = pneg %p30
      $region26: #{basic_block_forward.5} parent=23 // pred_check_branch
        %157 = sbr.rel (%p155) target = $region28
      $region27: #{basic_block_forward.5} parent=23 // pred_region
        %s158 = smul.u32 3, %s10
        %p159 = scmp.lt.s32.totalorder %s158, 5
        %s160 = scalar_select %p159, %s158, 5
        %s161 = smul.addr %s160, 2
        %s162 = smul.addr %s161, 4
        %s163 = scalar_lea.vmem %s0, %s162
        %s164 = smul.u32 3, %s10
      $region28: #{basic_block_forward.5} parent=23 // pred_fallthru
        _
      // Predicated region
      $region29: #{basic_block_forward.5} parent=23 // pred_check
        %p165 = pneg %p98
      $region30: #{basic_block_forward.5} parent=23 // pred_check_branch
        %167 = sbr.rel (%p165) target = $region32
      $region31: #{basic_block_forward.5} parent=23 // pred_region
        %s168 = smul.u32 3, %s10
        %p169 = scmp.lt.s32.totalorder %s168, 5
        %s170 = scalar_select %p169, %s168, 5
        %s171 = smul.addr %s170, 2
        %s172 = smul.addr %s171, 4
        %s173 = scalar_lea.vmem %s3, %s172
        %s174 = smul.u32 3, %s10
      $region32: #{basic_block_forward.5} parent=23 // pred_fallthru
        _
    $region24: #{basic_block_forward.5} parent=5 // pred_fallthru
      _
    %p175 = scmp.le.s32.totalorder 1, %s10
    %p176 = scmp.lt.s32.totalorder %s10, 3
    %p177 = pnand %p175, %p176
    %p178 = pneg %p177
    // Predicated region
    $region33: #{basic_block_forward.5} parent=5 // pred_check
      _
    $region34: #{basic_block_forward.5} parent=5 // pred_check_branch
      %180 = sbr.rel (%p177) target = $region36
    $region35: #{basic_block_forward.5} parent=5 // pred_region
      %s181 = ssub.s32 %s10, 1
      %s182 = smul.u32 3, %s15
      %p183 = scmp.lt.s32.totalorder %s182, 5
      %s184 = scalar_select %p183, %s182, 5
      %s185 = smul.addr %s184, 2
      %s186 = smul.addr %s185, 4
      %s187 = scalar_lea.vmem %s0, %s186
      %p188 = pneg %p36
      %p189 = pneg %p33
      %p190 = pneg %p57
      %p191 = pneg %p54
      %p192 = pneg %p78
      %p193 = pneg %p75
      %s194 = smul.u32 3, %s15
      %p195 = scmp.lt.s32.totalorder %s194, 5
      %s196 = scalar_select %p195, %s194, 5
      %s197 = smul.addr %s196, 2
      %s198 = smul.addr %s197, 4
      %s199 = scalar_lea.vmem %s3, %s198
      %p200 = pneg %p104
      %p201 = pneg %p101
      %p202 = pneg %p130
      %p203 = pneg %p127
      %s204 = smul.u32 3, %s15
      %p205 = scmp.lt.s32.totalorder %s204, 5
      %s206 = scalar_select %p205, %s204, 5
      %s207 = smul.addr %s206, 2
      %s208 = smul.addr %s207, 8
      %s209 = scalar_lea.vmem %s4, %s208
      %s210 = smul.u32 3, %s15
      %p211 = scmp.lt.s32.totalorder %s210, 5
      %s212 = scalar_select %p211, %s210, 5
      %s213 = smul.addr %s212, 2
      %s214 = smul.addr %s213, 4
      %s215 = scalar_lea.vmem %s0, %s214
      %s216 = smul.u32 3, %s15
      %s217 = smul.u32 3, %s15
      %p218 = scmp.lt.s32.totalorder %s217, 5
      %s219 = scalar_select %p218, %s217, 5
      %s220 = smul.addr %s219, 2
      %s221 = smul.addr %s220, 4
      %s222 = scalar_lea.vmem %s3, %s221
      %s223 = smul.u32 3, %s15
      %s224 = smul.u32 3, %s15
      %p225 = scmp.lt.s32.totalorder %s224, 5
      %s226 = scalar_select %p225, %s224, 5
      %s227 = smul.addr %s226, 2
      %s228 = smul.addr %s227, 8
      %s229 = scalar_lea.vmem %s4, %s228
      %s230 = smul.u32 3, %s15
      %v231 = vld [vmem:[%s215] sm:$0xf]
      %v232 = vld [vmem:[%s215 + $0x4] sm:$0xf]
      %v233 = vld [vmem:[%s215 + $0x8] sm:$0xf]
      %v234 = vld [vmem:[%s215 + $0xc] sm:$0xf]
      %v235 = vld [vmem:[%s215 + $0x10] sm:$0xf]
      %v236 = vld [vmem:[%s215 + $0x14] sm:$0xf]
      %v237 = vunpack.c.l.bf16 %v231
      %v238 = vunpack.c.l.bf16 %v232
      %v239 = vunpack.c.l.bf16 %v233
      %v240 = vunpack.c.l.bf16 %v234
      %v241 = vunpack.c.l.bf16 %v235
      %v242 = vunpack.c.l.bf16 %v236
      %v243 = vld [vmem:[%s222] sm:$0xf]
      %v244 = vld [vmem:[%s222 + $0x4] sm:$0xf]
      %v245 = vld [vmem:[%s222 + $0x8] sm:$0xf]
      %v246 = vld [vmem:[%s222 + $0xc] sm:$0xf]
      %v247 = vld [vmem:[%s222 + $0x10] sm:$0xf]
      %v248 = vld [vmem:[%s222 + $0x14] sm:$0xf]
      %v249 = vunpack.c.l.bf16 %v243
      %v250 = vunpack.c.l.bf16 %v244
      %v251 = vunpack.c.l.bf16 %v245
      %v252 = vunpack.c.l.bf16 %v246
      %v253 = vunpack.c.l.bf16 %v247
      %v254 = vunpack.c.l.bf16 %v248
      %v255 = vld [vmem:[%s1] sm:$0x1]
      %v257 = vlaneseq
      %v258 = vshrl.u32 %v257, 7
      %v259 = vsub.s32 0, %v258
      %v260 = vrot.slane %v255, %v259
      %v262 = vmul.f32 %v237, %v260
      %v263 = vmul.f32 %v238, %v260
      %v264 = vmul.f32 %v239, %v260
      %v265 = vmul.f32 %v240, %v260
      %v266 = vmul.f32 %v241, %v260
      %v267 = vmul.f32 %v242, %v260
      %v268 = vld [vmem:[%s2] sm:$0x1]
      %v270 = vlaneseq
      %v271 = vshrl.u32 %v270, 7
      %v272 = vsub.s32 0, %v271
      %v273 = vrot.slane %v268, %v272
      %v275 = vadd.f32 %v262, %v273
      %v276 = vadd.f32 %v263, %v273
      %v277 = vadd.f32 %v264, %v273
      %v278 = vadd.f32 %v265, %v273
      %v279 = vadd.f32 %v266, %v273
      %v280 = vadd.f32 %v267, %v273
      %v281 = vadd.f32 %v275, %v249
      %v282 = vadd.f32 %v276, %v250
      %v283 = vadd.f32 %v277, %v251
      %v284 = vadd.f32 %v278, %v252
      %v285 = vadd.f32 %v279, %v253
      %v286 = vadd.f32 %v280, %v254
      %v287 = vmax.f32 %v281, 0.0
      %v288 = vmax.f32 %v282, 0.0
      %v289 = vmax.f32 %v283, 0.0
      %v290 = vmax.f32 %v284, 0.0
      %v291 = vmax.f32 %v285, 0.0
      %v292 = vmax.f32 %v286, 0.0
      %293 = vst [vmem:[%s229] sm:$0xff] %v287
      %294 = vst [vmem:[%s229 + $0x8] sm:$0xff] %v288
      %295 = vst [vmem:[%s229 + $0x10] sm:$0xff] %v289
      %296 = vst [vmem:[%s229 + $0x18] sm:$0xff] %v290
      %297 = vst [vmem:[%s229 + $0x20] sm:$0xff] %v291
      %298 = vst [vmem:[%s229 + $0x28] sm:$0xff] %v292
      %s299 = smul.u32 3, %s15
      %p300 = scmp.lt.s32.totalorder %s299, 5
      %s301 = scalar_select %p300, %s299, 5
      %s302 = smul.addr %s301, 2
      %s303 = smul.addr %s302, 8
      %s304 = scalar_lea.vmem %s4, %s303
      // Predicated region
      $region37: #{basic_block_forward.5} parent=35 // pred_check
        %p305 = pneg %p127
      $region38: #{basic_block_forward.5} parent=35 // pred_check_branch
        %307 = sbr.rel (%p305) target = $region40
      $region39: #{basic_block_forward.5} parent=35 // pred_region
        %s308 = smul.u32 3, %s15
      $region40: #{basic_block_forward.5} parent=35 // pred_fallthru
        _
    $region36: #{basic_block_forward.5} parent=5 // pred_fallthru
      _
    %p309 = scmp.le.s32.totalorder 2, %s10
    // Predicated region
    $region41: #{basic_block_forward.5} parent=5 // pred_check
      %p310 = pneg %p309
    $region42: #{basic_block_forward.5} parent=5 // pred_check_branch
      %312 = sbr.rel (%p310) target = $region44
    $region43: #{basic_block_forward.5} parent=5 // pred_region
      %s313 = ssub.s32 %s10, 2
      // Predicated region
      $region45: #{basic_block_forward.5} parent=43 // pred_check
        %p314 = pneg %p133
      $region46: #{basic_block_forward.5} parent=43 // pred_check_branch
        %316 = sbr.rel (%p314) target = $region48
      $region47: #{basic_block_forward.5} parent=43 // pred_region
        %s317 = smul.u32 3, %s16
        %p318 = scmp.lt.s32.totalorder %s317, 5
        %s319 = scalar_select %p318, %s317, 5
        %s320 = smul.addr %s319, 2
        %s321 = smul.addr %s320, 8
        %s322 = scalar_lea.vmem %s4, %s321
      $region48: #{basic_block_forward.5} parent=43 // pred_fallthru
        _
    $region44: #{basic_block_forward.5} parent=5 // pred_fallthru
      _
  $region6: #{basic_block_forward.5} parent=0 // loop_footer
    %s14 = sadd.s32 1, %s10
  $region7: #{basic_block_forward.5} parent=0 // loop_footer_branch
    %9 = sbr.rel target = $region3
  $region8: #{basic_block_forward.5} parent=0 // loop_exit
    _

</llo_original>
